<compile_context>
chip_gen: v7x
topology: tpu7x:2x2x1
jax: 0.10.0
libtpu: 0.0.40
codegen_flags: <defaults>
</compile_context>

<pallas_src>
import jax
import jax.numpy as jnp
from jax.experimental import pallas as pl
from jax.experimental.pallas import tpu as pltpu


def _round_up(x, m):
    return (x + m - 1) // m * m


def _leaky_relu(x, slope=0.01):
    # F.leaky_relu default negative_slope = 0.01
    return jnp.where(x >= 0, x, slope * x)


# ---------------------------------------------------------------------------
# Kernel: one batch tile, all weights VMEM-resident.
# ---------------------------------------------------------------------------
def cda_conv_kernel(p_ref, wf_ref, w1_ref, w2_ref, w3_ref, out_ref):
    # Feature-model stand-in (linear + ReLU); global pool already done in XLA.
    # TODO(synk): the original feature_model is an abstract backbone; a pooled
    # linear+ReLU with matching output dim (feature_dim) is used as stand-in.
    feat = jnp.dot(p_ref[...], wf_ref[...],
                   preferred_element_type=jnp.float32)          # (TB, F)
    feat = jnp.maximum(feat, 0.0)

    # Fused heads (cls || ds): bf16 MXU inputs, f32 accumulation.
    h = _leaky_relu(jnp.dot(feat.astype(jnp.bfloat16), w1_ref[...],
                            preferred_element_type=jnp.float32))   # (TB, 1024)
    h = _leaky_relu(jnp.dot(h.astype(jnp.bfloat16), w2_ref[...],
                            preferred_element_type=jnp.float32))   # (TB, 512)
    out = jnp.dot(h.astype(jnp.bfloat16), w3_ref[...],
                  preferred_element_type=jnp.float32)              # (TB, 128)

    out_ref[...] = out.astype(out_ref.dtype)   # lane-dense, unmasked stores


# ---------------------------------------------------------------------------
# One-time weight preparation (transpose / fuse / pad / cast).  Hoisted out of
# the per-forward path.
# ---------------------------------------------------------------------------
def prepare_cda_weights(params, *, lane=128):
    C = params["wf"].shape[1]
    NC = params["w3"].shape[0]
    ND = params["w3_ds"].shape[0]

    # Feature linear, (in, out) layout, K padded to a lane multiple.
    c_pad = _round_up(C, lane)
    wf_t = jnp.zeros((c_pad, params["wf"].shape[0]), jnp.float32)
    wf_t = wf_t.at[:C, :].set(params["wf"].T)

    # Head layer 1: concat along the output dim -> (F, 1024).
    w1cat = jnp.concatenate([params["w1"].T, params["w1_ds"].T], axis=1)

    # Head layer 2: block-diagonal -> (1024, 512).
    w2_t, w2d_t = params["w2"].T, params["w2_ds"].T
    k1, n1 = w2_t.shape
    w2blk = jnp.zeros((2 * k1, 2 * n1), jnp.float32)
    w2blk = w2blk.at[:k1, :n1].set(w2_t).at[k1:, n1:].set(w2d_t)

    # Head layer 3: block-diagonal, output padded to a lane multiple -> (512, 128).
    w3_t, w3d_t = params["w3"].T, params["w3_ds"].T
    n_out = _round_up(NC + ND, lane)
    w3blk = jnp.zeros((2 * n1, n_out), jnp.float32)
    w3blk = w3blk.at[:n1, :NC].set(w3_t).at[n1:, NC:NC + ND].set(w3d_t)

    bf16 = lambda a: a.astype(jnp.bfloat16)
    return {
        "wf_t": bf16(wf_t), "w1cat": bf16(w1cat),
        "w2blk": bf16(w2blk), "w3blk": bf16(w3blk),
        "num_classes": NC, "num_ds_classes": ND,
        "c_pad": c_pad, "n_out_pad": n_out,
    }


# ---------------------------------------------------------------------------
# Forward wrapper.
# ---------------------------------------------------------------------------
def cda_conv_forward(x, prep, *, block_b=256):
    """x: (B, C, H, W) f32 NCHW.  prep: output of prepare_cda_weights."""
    B, C, H, W = x.shape
    NC, ND = prep["num_classes"], prep["num_ds_classes"]
    c_pad, n_out = prep["c_pad"], prep["n_out_pad"]

    # Global-average-pool (feature-model front end) in XLA so the Pallas kernel
    # only streams (B, C) features instead of (B, C, H*W).
    pooled = jnp.mean(x.reshape(B, C, H * W), axis=-1)            # (B, C) f32

    # Batch tile: 256 rows for real batches, padded to >=8 sublanes for tiny B.
    tb = min(block_b, _round_up(B, 8))
    b_pad = _round_up(B, tb)
    pooled_pad = jnp.zeros((b_pad, c_pad), jnp.bfloat16)
    pooled_pad = pooled_pad.at[:B, :C].set(pooled.astype(jnp.bfloat16))

    grid = (b_pad // tb,)
    w_spec = lambda shape: pl.BlockSpec(shape, lambda b: (0, 0))  # VMEM-resident

    out_slab = pl.pallas_call(
        cda_conv_kernel,
        out_shape=jax.ShapeDtypeStruct((b_pad, n_out), jnp.float32),
        grid=grid,
        in_specs=[
            pl.BlockSpec((tb, c_pad), lambda b: (b, 0)),   # streamed, double-buffered
            w_spec(prep["wf_t"].shape),
            w_spec(prep["w1cat"].shape),
            w_spec(prep["w2blk"].shape),
            w_spec(prep["w3blk"].shape),
        ],
        out_specs=pl.BlockSpec((tb, n_out), lambda b: (b, 0)),
        compiler_params=pltpu.CompilerParams(
            dimension_semantics=("parallel",),          # shard batch across TCs (v7x)
            vmem_limit_bytes=32 * 1024 * 1024,          # safe on v5e/v6e/v7x
        ),
    )(pooled_pad, prep["wf_t"], prep["w1cat"], prep["w2blk"], prep["w3blk"])

    return out_slab[:B, :NC], out_slab[:B, NC:NC + ND]


# ---------------------------------------------------------------------------
# Pure-JAX f32 reference of the same forward pass.
# ---------------------------------------------------------------------------
def _reference(x, params):
    B, C, H, W = x.shape
    pooled = jnp.mean(x.reshape(B, C, H * W), axis=-1)
    feat = jnp.maximum(pooled @ params["wf"].T, 0.0)

    def head(f, w1, w2, w3):
        h = _leaky_relu(f @ w1.T)
        h = _leaky_relu(h @ w2.T)
        return h @ w3.T

    return (head(feat, params["w1"], params["w2"], params["w3"]),
            head(feat, params["w1_ds"], params["w2_ds"], params["w3_ds"]))


if __name__ == "__main__":
    # Small, deterministic shapes consistent with the module.
    B, C, H, W = 2, 4, 16, 16
    feature_dim = 64
    num_classes = 7
    num_ds_classes = 3
    # with_label=False path: conv1_ds takes feature_dim inputs.

    key = jax.random.PRNGKey(0)
    ks = jax.random.split(key, 8)
    params = {
        # synthetic feature-model linear (feature_dim, C), PyTorch (out, in) layout
        "wf":    0.5    * jax.random.normal(ks[0], (feature_dim, C), jnp.float32),
        # classification head 1x1-conv weights (out, in)
        "w1":    0.125  * jax.random.normal(ks[1], (512, feature_dim), jnp.float32),
        "w2":    0.0442 * jax.random.normal(ks[2], (256, 512), jnp.float32),
        "w3":    0.0625 * jax.random.normal(ks[3], (num_classes, 256), jnp.float32),
        # domain head
        "w1_ds": 0.125  * jax.random.normal(ks[4], (512, feature_dim), jnp.float32),
        "w2_ds": 0.0442 * jax.random.normal(ks[5], (256, 512), jnp.float32),
        "w3_ds": 0.0625 * jax.random.normal(ks[6], (num_ds_classes, 256), jnp.float32),
    }
    x = jax.random.normal(ks[7], (B, C, H, W), jnp.float32)

    prep = prepare_cda_weights(params)          # one-time weight prep
    out_cls, out_ds = cda_conv_forward(x, prep)
    jax.block_until_ready((out_cls, out_ds))

    ref_cls, ref_ds = _reference(x, params)
    assert out_cls.shape == (B, num_classes)
    assert out_ds.shape == (B, num_ds_classes)
    # Kernel feeds the MXU bf16 inputs (f32 accumulation); compare against the
    # pure-f32 reference with bf16-appropriate tolerances.
    assert jnp.allclose(out_cls, ref_cls, rtol=3e-2, atol=3e-3)
    assert jnp.allclose(out_ds, ref_ds, rtol=3e-2, atol=3e-3)

    print("KERNEL_OK")
</pallas_src>

<mosaic_0001>
module attributes {stable_mosaic.version = 11 : i64} {
  func.func @cda_conv_kernel(%arg0: i32, %arg1: memref<8x128xbf16, #tpu.memory_space<vmem>>, %arg2: memref<128x64xbf16, #tpu.memory_space<vmem>>, %arg3: memref<64x1024xbf16, #tpu.memory_space<vmem>>, %arg4: memref<1024x512xbf16, #tpu.memory_space<vmem>>, %arg5: memref<512x128xbf16, #tpu.memory_space<vmem>>, %arg6: memref<8x128xf32, #tpu.memory_space<vmem>>) attributes {dimension_semantics = [#tpu.dimension_semantics<parallel>], iteration_bounds = array<i64: 1>, scalar_prefetch = 0 : i64, scratch_operands = 0 : i64, tpu.core_type = #tpu.core_type<tc>, window_params = [{transform_indices = @transform_0, window_bounds = array<i64: 8, 128>}, {pipeline_mode = #tpu.pipeline_mode<synchronous>, transform_indices = @transform_1, window_bounds = array<i64: 128, 64>}, {pipeline_mode = #tpu.pipeline_mode<synchronous>, transform_indices = @transform_2, window_bounds = array<i64: 64, 1024>}, {pipeline_mode = #tpu.pipeline_mode<synchronous>, transform_indices = @transform_3, window_bounds = array<i64: 1024, 512>}, {pipeline_mode = #tpu.pipeline_mode<synchronous>, transform_indices = @transform_4, window_bounds = array<i64: 512, 128>}, {transform_indices = @transform_5, window_bounds = array<i64: 8, 128>}]} {
    %c0 = arith.constant 0 : index
    %c0_0 = arith.constant 0 : index
    %0 = vector.load %arg1[%c0, %c0_0] : memref<8x128xbf16, #tpu.memory_space<vmem>>, vector<8x128xbf16>
    %c0_1 = arith.constant 0 : index
    %c0_2 = arith.constant 0 : index
    %1 = vector.load %arg2[%c0_1, %c0_2] : memref<128x64xbf16, #tpu.memory_space<vmem>>, vector<128x64xbf16>
    %cst = arith.constant dense<0.000000e+00> : vector<8x64xf32>
    %2 = tpu.matmul %0, %1, %cst {dimension_numbers = #tpu.dot_dimension_numbers<[1], [0], [0], [1], [0, 0, 1, 1], [], []>} : vector<8x128xbf16>, vector<128x64xbf16>, vector<8x64xf32> -> vector<8x64xf32>
    %cst_3 = arith.constant 0.000000e+00 : f32
    %3 = vector.broadcast %cst_3 : f32 to vector<8x64xf32>
    %4 = arith.maximumf %2, %3 : vector<8x64xf32>
    %5 = arith.truncf %4 : vector<8x64xf32> to vector<8x64xbf16>
    %c0_4 = arith.constant 0 : index
    %c0_5 = arith.constant 0 : index
    %6 = vector.load %arg3[%c0_4, %c0_5] : memref<64x1024xbf16, #tpu.memory_space<vmem>>, vector<64x1024xbf16>
    %cst_6 = arith.constant dense<0.000000e+00> : vector<8x1024xf32>
    %7 = tpu.matmul %5, %6, %cst_6 {dimension_numbers = #tpu.dot_dimension_numbers<[1], [0], [0], [1], [0, 0, 1, 1], [], []>} : vector<8x64xbf16>, vector<64x1024xbf16>, vector<8x1024xf32> -> vector<8x1024xf32>
    %cst_7 = arith.constant 0.000000e+00 : f32
    %8 = vector.broadcast %cst_7 : f32 to vector<8x1024xf32>
    %9 = arith.cmpf oge, %7, %8 : vector<8x1024xf32>
    %cst_8 = arith.constant 0.00999999977 : f32
    %10 = vector.broadcast %cst_8 : f32 to vector<8x1024xf32>
    %11 = arith.mulf %10, %7 : vector<8x1024xf32>
    %12 = arith.select %9, %7, %11 : vector<8x1024xi1>, vector<8x1024xf32>
    %13 = arith.truncf %12 : vector<8x1024xf32> to vector<8x1024xbf16>
    %c0_9 = arith.constant 0 : index
    %c0_10 = arith.constant 0 : index
    %14 = vector.load %arg4[%c0_9, %c0_10] : memref<1024x512xbf16, #tpu.memory_space<vmem>>, vector<1024x512xbf16>
    %cst_11 = arith.constant dense<0.000000e+00> : vector<8x512xf32>
    %15 = tpu.matmul %13, %14, %cst_11 {dimension_numbers = #tpu.dot_dimension_numbers<[1], [0], [0], [1], [0, 0, 1, 1], [], []>} : vector<8x1024xbf16>, vector<1024x512xbf16>, vector<8x512xf32> -> vector<8x512xf32>
    %cst_12 = arith.constant 0.000000e+00 : f32
    %16 = vector.broadcast %cst_12 : f32 to vector<8x512xf32>
    %17 = arith.cmpf oge, %15, %16 : vector<8x512xf32>
    %cst_13 = arith.constant 0.00999999977 : f32
    %18 = vector.broadcast %cst_13 : f32 to vector<8x512xf32>
    %19 = arith.mulf %18, %15 : vector<8x512xf32>
    %20 = arith.select %17, %15, %19 : vector<8x512xi1>, vector<8x512xf32>
    %21 = arith.truncf %20 : vector<8x512xf32> to vector<8x512xbf16>
    %c0_14 = arith.constant 0 : index
    %c0_15 = arith.constant 0 : index
    %22 = vector.load %arg5[%c0_14, %c0_15] : memref<512x128xbf16, #tpu.memory_space<vmem>>, vector<512x128xbf16>
    %cst_16 = arith.constant dense<0.000000e+00> : vector<8x128xf32>
    %23 = tpu.matmul %21, %22, %cst_16 {dimension_numbers = #tpu.dot_dimension_numbers<[1], [0], [0], [1], [0, 0, 1, 1], [], []>} : vector<8x512xbf16>, vector<512x128xbf16>, vector<8x128xf32> -> vector<8x128xf32>
    %c0_17 = arith.constant 0 : index
    %c0_18 = arith.constant 0 : index
    %24 = vector.load %arg6[%c0_17, %c0_18] : memref<8x128xf32, #tpu.memory_space<vmem>>, vector<8x128xf32>
    tpu.vector_store %arg6[%c0_17, %c0_18], %23 {strides = array<i32>} : memref<8x128xf32, #tpu.memory_space<vmem>>, vector<8x128xf32>,
    return
  }
  func.func @transform_0(%arg0: i32) -> (i32, i32) {
    %c0_i32 = arith.constant 0 : i32
    %c0_i32_0 = arith.constant 0 : i32
    return %arg0, %c0_i32 : i32, i32
  }
  func.func @transform_1(%arg0: i32) -> (i32, i32) {
    %c0_i32 = arith.constant 0 : i32
    %c0_i32_0 = arith.constant 0 : i32
    %c0_i32_1 = arith.constant 0 : i32
    return %c0_i32, %c0_i32_0 : i32, i32
  }
  func.func @transform_2(%arg0: i32) -> (i32, i32) {
    %c0_i32 = arith.constant 0 : i32
    %c0_i32_0 = arith.constant 0 : i32
    %c0_i32_1 = arith.constant 0 : i32
    return %c0_i32, %c0_i32_0 : i32, i32
  }
  func.func @transform_3(%arg0: i32) -> (i32, i32) {
    %c0_i32 = arith.constant 0 : i32
    %c0_i32_0 = arith.constant 0 : i32
    %c0_i32_1 = arith.constant 0 : i32
    return %c0_i32, %c0_i32_0 : i32, i32
  }
  func.func @transform_4(%arg0: i32) -> (i32, i32) {
    %c0_i32 = arith.constant 0 : i32
    %c0_i32_0 = arith.constant 0 : i32
    %c0_i32_1 = arith.constant 0 : i32
    return %c0_i32, %c0_i32_0 : i32, i32
  }
  func.func @transform_5(%arg0: i32) -> (i32, i32) {
    %c0_i32 = arith.constant 0 : i32
    %c0_i32_0 = arith.constant 0 : i32
    return %arg0, %c0_i32 : i32, i32
  }
}

</mosaic_0001>

<llo_original>
// kernel: tpu_custom_call.1
$region0: #{tpu_custom_call.1}
  #allocation0 [shape = 'u32[]', space=smem, size = 0x4, offset = 0x4, fixed_abs, tag = 'smem constant byte address 0x4 - core index']
  #allocation1 [shape = 'u32[144,128]{1,0:T(1,128)}', space=vmem, size = 0x12000, scoped, tag = 'internal scratch']
  %s0 = inlined_call_operand.vmem [shape: bf16[8,128], index: 0, kind: input, shape index: {}]
  %s1 = inlined_call_operand.vmem [shape: bf16[128,64], index: 1, kind: input, shape index: {}]
  %s2 = inlined_call_operand.hbm [shape: bf16[64,1024], index: 2, kind: input, shape index: {}]
  %s3 = inlined_call_operand.hbm [shape: bf16[1024,512], index: 3, kind: input, shape index: {}]
  %s4 = inlined_call_operand.hbm [shape: bf16[512,128], index: 4, kind: input, shape index: {}]
  %s5 = inlined_call_operand.hbm [shape: f32[8,128], index: 5, kind: output, shape index: {}]
  %s6 = sld [smem:[#allocation0]]
  $region42: #{tpu_custom_call.1} parent=0
    _
  %s8 = ssub.s32 1, %s6
  %s9 = scalar_select 0, %s8, %s6
  $region1: #{tpu_custom_call.1} parent=0
    #allocation2 [shape = 'u8[131072]{0}', space=vmem, size = 0x20000, scoped, tag = 'input window, operand 2, single buffered']
    #allocation3 [shape = 's32[1]{0}', space=sflag, size = 0x4, scoped, tag = 'scoped memory for tpu_custom_call.1']
    #allocation4 [shape = 's32[1]{0}', space=sflag, size = 0x4, scoped, tag = 'scoped memory for tpu_custom_call.1']
    #allocation5 [shape = 'u8[1048576]{0}', space=vmem, size = 0x100000, scoped, tag = 'input window, operand 3, single buffered']
    #allocation6 [shape = 's32[1]{0}', space=sflag, size = 0x4, scoped, tag = 'scoped memory for tpu_custom_call.1']
    #allocation7 [shape = 'u8[131072]{0}', space=vmem, size = 0x20000, scoped, tag = 'input window, operand 4, single buffered']
    #allocation8 [shape = 'u8[4096]{0}', space=vmem, size = 0x1000, scoped, tag = 'output window, operand 0, single buffered']
    %10 = vsyncpa [#allocation3], 0
    %11 = vsyncpa [#allocation6], 0
    %12 = vsyncpa [#allocation4], 0
    // Predicated region
    $region2: #{tpu_custom_call.1} parent=1 // pred_check
      _
    $region3: #{tpu_custom_call.1} parent=1 // pred_check_branch
      %14 = sbr.rel (0) target = $region5
    $region4: #{tpu_custom_call.1} parent=1 // pred_region
      _
    $region5: #{tpu_custom_call.1} parent=1 // pred_fallthru
      _
    // Predicated region
    $region6: #{tpu_custom_call.1} parent=1 // pred_check
      _
    $region7: #{tpu_custom_call.1} parent=1 // pred_check_branch
      %16 = sbr.rel (0) target = $region9
    $region8: #{tpu_custom_call.1} parent=1 // pred_region
      _
    $region9: #{tpu_custom_call.1} parent=1 // pred_fallthru
      _
    // Predicated region
    $region10: #{tpu_custom_call.1} parent=1 // pred_check
      _
    $region11: #{tpu_custom_call.1} parent=1 // pred_check_branch
      %18 = sbr.rel (0) target = $region13
    $region12: #{tpu_custom_call.1} parent=1 // pred_region
      %s20 = ssub.s32 4096, 4096
      %21 = vsyncadd [#allocation3], %s20
      %s22 = sshll.u32 [#allocation2], 4
      %s23 = int_to_ptr.vmem [resolvable:$true] %s22
      %28 = dma.hbm_to_vmem [thread:$0]  %s2, 4096, %s23, [#allocation3], 512, 512, 32
    $region13: #{tpu_custom_call.1} parent=1 // pred_fallthru
      _
    // Predicated region
    $region14: #{tpu_custom_call.1} parent=1 // pred_check
      _
    $region15: #{tpu_custom_call.1} parent=1 // pred_check_branch
      %30 = sbr.rel (0) target = $region17
    $region16: #{tpu_custom_call.1} parent=1 // pred_region
      %s32 = ssub.s32 32768, 32768
      %33 = vsyncadd [#allocation6], %s32
      %s34 = sshll.u32 [#allocation5], 4
      %s35 = int_to_ptr.vmem [resolvable:$true] %s34
      %40 = dma.hbm_to_vmem [thread:$0]  %s3, 32768, %s35, [#allocation6], 256, 256, 16
    $region17: #{tpu_custom_call.1} parent=1 // pred_fallthru
      _
    // Predicated region
    $region18: #{tpu_custom_call.1} parent=1 // pred_check
      _
    $region19: #{tpu_custom_call.1} parent=1 // pred_check_branch
      %42 = sbr.rel (0) target = $region21
    $region20: #{tpu_custom_call.1} parent=1 // pred_region
      %s44 = ssub.s32 4096, 4096
      %45 = vsyncadd [#allocation6], %s44
      %s46 = sshll.u32 [#allocation7], 4
      %s47 = int_to_ptr.vmem [resolvable:$true] %s46
      %52 = dma.hbm_to_vmem [thread:$0]  %s4, 4096, %s47, [#allocation6], 64, 64, 4
    $region21: #{tpu_custom_call.1} parent=1 // pred_fallthru
      _
    // Predicated region
    $region22: #{tpu_custom_call.1} parent=1 // pred_check
      _
    $region23: #{tpu_custom_call.1} parent=1 // pred_check_branch
      %54 = sbr.rel (0) target = $region25
    $region24: #{tpu_custom_call.1} parent=1 // pred_region
      %55 = dma.done [#allocation3], 4096
    $region25: #{tpu_custom_call.1} parent=1 // pred_fallthru
      _
    // Predicated region
    $region26: #{tpu_custom_call.1} parent=1 // pred_check
      _
    $region27: #{tpu_custom_call.1} parent=1 // pred_check_branch
      %57 = sbr.rel (0) target = $region29
    $region28: #{tpu_custom_call.1} parent=1 // pred_region
      %58 = dma.done [#allocation6], 32768
    $region29: #{tpu_custom_call.1} parent=1 // pred_fallthru
      _
    // Predicated region
    $region30: #{tpu_custom_call.1} parent=1 // pred_check
      _
    $region31: #{tpu_custom_call.1} parent=1 // pred_check_branch
      %60 = sbr.rel (0) target = $region33
    $region32: #{tpu_custom_call.1} parent=1 // pred_region
      %61 = dma.done [#allocation6], 4096
    $region33: #{tpu_custom_call.1} parent=1 // pred_fallthru
      _
    %v63 = vld [vmem:[%s0] sm:$0xf]
    %v64 = vld [vmem:[%s1] sm:$0xf]
    %v65 = vld [vmem:[%s1 + $0x4] sm:$0xf]
    %v66 = vld [vmem:[%s1 + $0x8] sm:$0xf]
    %v67 = vld [vmem:[%s1 + $0xc] sm:$0xf]
    %v68 = vld [vmem:[%s1 + $0x10] sm:$0xf]
    %v69 = vld [vmem:[%s1 + $0x14] sm:$0xf]
    %v70 = vld [vmem:[%s1 + $0x18] sm:$0xf]
    %v71 = vld [vmem:[%s1 + $0x1c] sm:$0xf]
    %v72 = vld [vmem:[%s1 + $0x20] sm:$0xf]
    %v73 = vld [vmem:[%s1 + $0x24] sm:$0xf]
    %v74 = vld [vmem:[%s1 + $0x28] sm:$0xf]
    %v75 = vld [vmem:[%s1 + $0x2c] sm:$0xf]
    %v76 = vld [vmem:[%s1 + $0x30] sm:$0xf]
    %v77 = vld [vmem:[%s1 + $0x34] sm:$0xf]
    %v78 = vld [vmem:[%s1 + $0x38] sm:$0xf]
    %v79 = vld [vmem:[%s1 + $0x3c] sm:$0xf]
    %v96 = vunpack.c.l.b16 %v64
    %v97 = vunpack.c.l.b16 %v65
    %v98 = vunpack.c.l.b16 %v66
    %v99 = vunpack.c.l.b16 %v67
    %v100 = vunpack.c.l.b16 %v68
    %v101 = vunpack.c.l.b16 %v69
    %v102 = vunpack.c.l.b16 %v70
    %v103 = vunpack.c.l.b16 %v71
    %v104 = vunpack.c.l.b16 %v72
    %v105 = vunpack.c.l.b16 %v73
    %v106 = vunpack.c.l.b16 %v74
    %v107 = vunpack.c.l.b16 %v75
    %v108 = vunpack.c.l.b16 %v76
    %v109 = vunpack.c.l.b16 %v77
    %v110 = vunpack.c.l.b16 %v78
    %v111 = vunpack.c.l.b16 %v79
    %v112 = vpack.c.b16 %v97, %v96
    %v113 = vpack.c.b16 %v99, %v98
    %v114 = vpack.c.b16 %v101, %v100
    %v115 = vpack.c.b16 %v103, %v102
    %v116 = vpack.c.b16 %v105, %v104
    %v117 = vpack.c.b16 %v107, %v106
    %v118 = vpack.c.b16 %v109, %v108
    %v119 = vpack.c.b16 %v111, %v110
    %128 = vmatprep.subr.bf16.mxu0 0
    %129 = vmatpush1.bf16.msra.mxu0 %v112
    %130 = vmatprep.subr.bf16.mxu0 0
    %131 = vmatpush1.bf16.msra.mxu0 %v113
    %132 = vmatprep.subr.bf16.mxu0 0
    %133 = vmatpush1.bf16.msra.mxu0 %v114
    %134 = vmatprep.subr.bf16.mxu0 0
    %135 = vmatpush1.bf16.msra.mxu0 %v115
    %136 = vmatprep.subr.bf16.mxu0 0
    %137 = vmatpush1.bf16.msra.mxu0 %v116
    %138 = vmatprep.subr.bf16.mxu0 0
    %139 = vmatpush1.bf16.msra.mxu0 %v117
    %140 = vmatprep.subr.bf16.mxu0 0
    %141 = vmatpush1.bf16.msra.mxu0 %v118
    %142 = vmatprep.subr.bf16.mxu0 0
    %143 = vmatpush1.bf16.msra.mxu0 %v119
    %144 = vmatprep.subr.bf16.mxu0 0
    %145 = vmatpush1.bf16.msra.mxu0 0
    %146 = vmatprep.subr.bf16.mxu0 0
    %147 = vmatpush1.bf16.msra.mxu0 0
    %148 = vmatprep.subr.bf16.mxu0 0
    %149 = vmatpush1.bf16.msra.mxu0 0
    %150 = vmatprep.subr.bf16.mxu0 0
    %151 = vmatpush1.bf16.msra.mxu0 0
    %152 = vmatprep.subr.bf16.mxu0 0
    %153 = vmatpush1.bf16.msra.mxu0 0
    %154 = vmatprep.subr.bf16.mxu0 0
    %155 = vmatpush1.bf16.msra.mxu0 0
    %156 = vmatprep.subr.bf16.mxu0 0
    %157 = vmatpush1.bf16.msra.mxu0 0
    %158 = vmatprep.subr.bf16.mxu0 0
    %159 = vmatpush1.bf16.msra.mxu0 0
    %160 = vmatprep.mubr.bf16.mxu0 0
    %161 = vmatmul.mubr.bf16.gmra.mrb[0].mxu0 %v63
    %v162 = vpop.f32.mrb[0].mxu0
    %v163 = vadd.f32 0.0, %v162
    %v164 = vpop.f32.mrb[0].mxu0
    %v165 = vpop.f32.mrb[0].mxu0
    %v166 = vpop.f32.mrb[0].mxu0
    %167 = vdwg.mxu0
    %v168 = vmax.f32 %v163, 0.0
    %v169 = vpack.c.bf16 %v168, %v168
    %v170 = vld [vmem:[#allocation2] sm:$0xff]
    %v171 = vld [vmem:[#allocation2 + $0x8] sm:$0xff]
    %v172 = vld [vmem:[#allocation2 + $0x10] sm:$0xff]
    %v173 = vld [vmem:[#allocation2 + $0x18] sm:$0xff]
    %v174 = vld [vmem:[#allocation2 + $0x20] sm:$0xff]
    %v175 = vld [vmem:[#allocation2 + $0x28] sm:$0xff]
    %v176 = vld [vmem:[#allocation2 + $0x30] sm:$0xff]
    %v177 = vld [vmem:[#allocation2 + $0x38] sm:$0xff]
    %v178 = vld [vmem:[#allocation2 + $0x40] sm:$0xff]
    %v179 = vld [vmem:[#allocation2 + $0x48] sm:$0xff]
    %v180 = vld [vmem:[#allocation2 + $0x50] sm:$0xff]
    %v181 = vld [vmem:[#allocation2 + $0x58] sm:$0xff]
    %v182 = vld [vmem:[#allocation2 + $0x60] sm:$0xff]
    %v183 = vld [vmem:[#allocation2 + $0x68] sm:$0xff]
    %v184 = vld [vmem:[#allocation2 + $0x70] sm:$0xff]
    %v185 = vld [vmem:[#allocation2 + $0x78] sm:$0xff]
    %v186 = vld [vmem:[#allocation2 + $0x80] sm:$0xff]
    %v187 = vld [vmem:[#allocation2 + $0x88] sm:$0xff]
    %v188 = vld [vmem:[#allocation2 + $0x90] sm:$0xff]
    %v189 = vld [vmem:[#allocation2 + $0x98] sm:$0xff]
    %v190 = vld [vmem:[#allocation2 + $0xa0] sm:$0xff]
    %v191 = vld [vmem:[#allocation2 + $0xa8] sm:$0xff]
    %v192 = vld [vmem:[#allocation2 + $0xb0] sm:$0xff]
    %v193 = vld [vmem:[#allocation2 + $0xb8] sm:$0xff]
    %v194 = vld [vmem:[#allocation2 + $0xc0] sm:$0xff]
    %v195 = vld [vmem:[#allocation2 + $0xc8] sm:$0xff]
    %v196 = vld [vmem:[#allocation2 + $0xd0] sm:$0xff]
    %v197 = vld [vmem:[#allocation2 + $0xd8] sm:$0xff]
    %v198 = vld [vmem:[#allocation2 + $0xe0] sm:$0xff]
    %v199 = vld [vmem:[#allocation2 + $0xe8] sm:$0xff]
    %v200 = vld [vmem:[#allocation2 + $0xf0] sm:$0xff]
    %v201 = vld [vmem:[#allocation2 + $0xf8] sm:$0xff]
    %v234 = vunpack.c.l.b16 %v170
    %v235 = vunpack.c.h.b16 %v170
    %v236 = vunpack.c.l.b16 %v171
    %v237 = vunpack.c.h.b16 %v171
    %v238 = vunpack.c.l.b16 %v172
    %v239 = vunpack.c.h.b16 %v172
    %v240 = vunpack.c.l.b16 %v173
    %v241 = vunpack.c.h.b16 %v173
    %v242 = vunpack.c.l.b16 %v174
    %v243 = vunpack.c.h.b16 %v174
    %v244 = vunpack.c.l.b16 %v175
    %v245 = vunpack.c.h.b16 %v175
    %v246 = vunpack.c.l.b16 %v176
    %v247 = vunpack.c.h.b16 %v176
    %v248 = vunpack.c.l.b16 %v177
    %v249 = vunpack.c.h.b16 %v177
    %v250 = vunpack.c.l.b16 %v178
    %v251 = vunpack.c.h.b16 %v178
    %v252 = vunpack.c.l.b16 %v179
    %v253 = vunpack.c.h.b16 %v179
    %v254 = vunpack.c.l.b16 %v180
    %v255 = vunpack.c.h.b16 %v180
    %v256 = vunpack.c.l.b16 %v181
    %v257 = vunpack.c.h.b16 %v181
    %v258 = vunpack.c.l.b16 %v182
    %v259 = vunpack.c.h.b16 %v182
    %v260 = vunpack.c.l.b16 %v183
    %v261 = vunpack.c.h.b16 %v183
    %v262 = vunpack.c.l.b16 %v184
    %v263 = vunpack.c.h.b16 %v184
    %v264 = vunpack.c.l.b16 %v185
    %v265 = vunpack.c.h.b16 %v185
    %v266 = vunpack.c.l.b16 %v186
    %v267 = vunpack.c.h.b16 %v186
    %v268 = vunpack.c.l.b16 %v187
    %v269 = vunpack.c.h.b16 %v187
    %v270 = vunpack.c.l.b16 %v188
    %v271 = vunpack.c.h.b16 %v188
    %v272 = vunpack.c.l.b16 %v189
    %v273 = vunpack.c.h.b16 %v189
    %v274 = vunpack.c.l.b16 %v190
    %v275 = vunpack.c.h.b16 %v190
    %v276 = vunpack.c.l.b16 %v191
    %v277 = vunpack.c.h.b16 %v191
    %v278 = vunpack.c.l.b16 %v192
    %v279 = vunpack.c.h.b16 %v192
    %v280 = vunpack.c.l.b16 %v193
    %v281 = vunpack.c.h.b16 %v193
    %v282 = vunpack.c.l.b16 %v194
    %v283 = vunpack.c.h.b16 %v194
    %v284 = vunpack.c.l.b16 %v195
    %v285 = vunpack.c.h.b16 %v195
    %v286 = vunpack.c.l.b16 %v196
    %v287 = vunpack.c.h.b16 %v196
    %v288 = vunpack.c.l.b16 %v197
    %v289 = vunpack.c.h.b16 %v197
    %v290 = vunpack.c.l.b16 %v198
    %v291 = vunpack.c.h.b16 %v198
    %v292 = vunpack.c.l.b16 %v199
    %v293 = vunpack.c.h.b16 %v199
    %v294 = vunpack.c.l.b16 %v200
    %v295 = vunpack.c.h.b16 %v200
    %v296 = vunpack.c.l.b16 %v201
    %v297 = vunpack.c.h.b16 %v201
    %v298 = vpack.c.b16 %v242, %v234
    %v299 = vpack.c.b16 %v243, %v235
    %v300 = vpack.c.b16 %v244, %v236
    %v301 = vpack.c.b16 %v245, %v237
    %v302 = vpack.c.b16 %v246, %v238
    %v303 = vpack.c.b16 %v247, %v239
    %v304 = vpack.c.b16 %v248, %v240
    %v305 = vpack.c.b16 %v249, %v241
    %v306 = vpack.c.b16 %v258, %v250
    %v307 = vpack.c.b16 %v259, %v251
    %v308 = vpack.c.b16 %v260, %v252
    %v309 = vpack.c.b16 %v261, %v253
    %v310 = vpack.c.b16 %v262, %v254
    %v311 = vpack.c.b16 %v263, %v255
    %v312 = vpack.c.b16 %v264, %v256
    %v313 = vpack.c.b16 %v265, %v257
    %v314 = vpack.c.b16 %v274, %v266
    %v315 = vpack.c.b16 %v275, %v267
    %v316 = vpack.c.b16 %v276, %v268
    %v317 = vpack.c.b16 %v277, %v269
    %v318 = vpack.c.b16 %v278, %v270
    %v319 = vpack.c.b16 %v279, %v271
    %v320 = vpack.c.b16 %v280, %v272
    %v321 = vpack.c.b16 %v281, %v273
    %v322 = vpack.c.b16 %v290, %v282
    %v323 = vpack.c.b16 %v291, %v283
    %v324 = vpack.c.b16 %v292, %v284
    %v325 = vpack.c.b16 %v293, %v285
    %v326 = vpack.c.b16 %v294, %v286
    %v327 = vpack.c.b16 %v295, %v287
    %v328 = vpack.c.b16 %v296, %v288
    %v329 = vpack.c.b16 %v297, %v289
    %vm362 = vcmask 523264
    %v364 = vsel %vm362, %v169, 0
    %366 = vmatprep.subr.bf16.mxu0 %v299
    %367 = vmatpush1.bf16.msra.mxu0 %v298
    %368 = vmatprep.subr.bf16.mxu0 %v307
    %369 = vmatpush1.bf16.msra.mxu0 %v306
    %370 = vmatprep.subr.bf16.mxu0 %v315
    %371 = vmatpush1.bf16.msra.mxu0 %v314
    %372 = vmatprep.subr.bf16.mxu0 %v323
    %373 = vmatpush1.bf16.msra.mxu0 %v322
    %374 = vmatprep.subr.bf16.mxu0 0
    %375 = vmatpush1.bf16.msra.mxu0 0
    %376 = vmatprep.subr.bf16.mxu0 0
    %377 = vmatpush1.bf16.msra.mxu0 0
    %378 = vmatprep.subr.bf16.mxu0 0
    %379 = vmatpush1.bf16.msra.mxu0 0
    %380 = vmatprep.subr.bf16.mxu0 0
    %381 = vmatpush1.bf16.msra.mxu0 0
    %382 = vmatprep.subr.bf16.mxu0 0
    %383 = vmatpush1.bf16.msra.mxu0 0
    %384 = vmatprep.subr.bf16.mxu0 0
    %385 = vmatpush1.bf16.msra.mxu0 0
    %386 = vmatprep.subr.bf16.mxu0 0
    %387 = vmatpush1.bf16.msra.mxu0 0
    %388 = vmatprep.subr.bf16.mxu0 0
    %389 = vmatpush1.bf16.msra.mxu0 0
    %390 = vmatprep.subr.bf16.mxu0 0
    %391 = vmatpush1.bf16.msra.mxu0 0
    %392 = vmatprep.subr.bf16.mxu0 0
    %393 = vmatpush1.bf16.msra.mxu0 0
    %394 = vmatprep.subr.bf16.mxu0 0
    %395 = vmatpush1.bf16.msra.mxu0 0
    %396 = vmatprep.subr.bf16.mxu0 0
    %397 = vmatpush1.bf16.msra.mxu0 0
    %398 = vmatprep.mubr.bf16.mxu0 0
    %399 = vmatmul.mubr.bf16.gmra.mrb[0].mxu0 %v364
    %v400 = vpop.f32.mrb[0].mxu0
    %v401 = vadd.f32 0.0, %v400
    %v402 = vpop.f32.mrb[0].mxu0
    %v403 = vadd.f32 0.0, %v402
    %v404 = vpop.f32.mrb[0].mxu0
    %v405 = vpop.f32.mrb[0].mxu0
    %406 = vdwg.mxu0
    %407 = vmatprep.subr.bf16.mxu0 %v301
    %408 = vmatpush1.bf16.msra.mxu0 %v300
    %409 = vmatprep.subr.bf16.mxu0 %v309
    %410 = vmatpush1.bf16.msra.mxu0 %v308
    %411 = vmatprep.subr.bf16.mxu0 %v317
    %412 = vmatpush1.bf16.msra.mxu0 %v316
    %413 = vmatprep.subr.bf16.mxu0 %v325
    %414 = vmatpush1.bf16.msra.mxu0 %v324
    %415 = vmatprep.subr.bf16.mxu0 0
    %416 = vmatpush1.bf16.msra.mxu0 0
    %417 = vmatprep.subr.bf16.mxu0 0
    %418 = vmatpush1.bf16.msra.mxu0 0
    %419 = vmatprep.subr.bf16.mxu0 0
    %420 = vmatpush1.bf16.msra.mxu0 0
    %421 = vmatprep.subr.bf16.mxu0 0
    %422 = vmatpush1.bf16.msra.mxu0 0
    %423 = vmatprep.subr.bf16.mxu0 0
    %424 = vmatpush1.bf16.msra.mxu0 0
    %425 = vmatprep.subr.bf16.mxu0 0
    %426 = vmatpush1.bf16.msra.mxu0 0
    %427 = vmatprep.subr.bf16.mxu0 0
    %428 = vmatpush1.bf16.msra.mxu0 0
    %429 = vmatprep.subr.bf16.mxu0 0
    %430 = vmatpush1.bf16.msra.mxu0 0
    %431 = vmatprep.subr.bf16.mxu0 0
    %432 = vmatpush1.bf16.msra.mxu0 0
    %433 = vmatprep.subr.bf16.mxu0 0
    %434 = vmatpush1.bf16.msra.mxu0 0
    %435 = vmatprep.subr.bf16.mxu0 0
    %436 = vmatpush1.bf16.msra.mxu0 0
    %437 = vmatprep.subr.bf16.mxu0 0
    %438 = vmatpush1.bf16.msra.mxu0 0
    %439 = vmatprep.mubr.bf16.mxu0 0
    %440 = vmatmul.mubr.bf16.gmra.mrb[0].mxu0 %v364
    %v441 = vpop.f32.mrb[0].mxu0
    %v442 = vadd.f32 0.0, %v441
    %v443 = vpop.f32.mrb[0].mxu0
    %v444 = vadd.f32 0.0, %v443
    %v445 = vpop.f32.mrb[0].mxu0
    %v446 = vpop.f32.mrb[0].mxu0
    %447 = vdwg.mxu0
    %448 = vmatprep.subr.bf16.mxu0 %v303
    %449 = vmatpush1.bf16.msra.mxu0 %v302
    %450 = vmatprep.subr.bf16.mxu0 %v311
    %451 = vmatpush1.bf16.msra.mxu0 %v310
    %452 = vmatprep.subr.bf16.mxu0 %v319
    %453 = vmatpush1.bf16.msra.mxu0 %v318
    %454 = vmatprep.subr.bf16.mxu0 %v327
    %455 = vmatpush1.bf16.msra.mxu0 %v326
    %456 = vmatprep.subr.bf16.mxu0 0
    %457 = vmatpush1.bf16.msra.mxu0 0
    %458 = vmatprep.subr.bf16.mxu0 0
    %459 = vmatpush1.bf16.msra.mxu0 0
    %460 = vmatprep.subr.bf16.mxu0 0
    %461 = vmatpush1.bf16.msra.mxu0 0
    %462 = vmatprep.subr.bf16.mxu0 0
    %463 = vmatpush1.bf16.msra.mxu0 0
    %464 = vmatprep.subr.bf16.mxu0 0
    %465 = vmatpush1.bf16.msra.mxu0 0
    %466 = vmatprep.subr.bf16.mxu0 0
    %467 = vmatpush1.bf16.msra.mxu0 0
    %468 = vmatprep.subr.bf16.mxu0 0
    %469 = vmatpush1.bf16.msra.mxu0 0
    %470 = vmatprep.subr.bf16.mxu0 0
    %471 = vmatpush1.bf16.msra.mxu0 0
    %472 = vmatprep.subr.bf16.mxu0 0
    %473 = vmatpush1.bf16.msra.mxu0 0
    %474 = vmatprep.subr.bf16.mxu0 0
    %475 = vmatpush1.bf16.msra.mxu0 0
    %476 = vmatprep.subr.bf16.mxu0 0
    %477 = vmatpush1.bf16.msra.mxu0 0
    %478 = vmatprep.subr.bf16.mxu0 0
    %479 = vmatpush1.bf16.msra.mxu0 0
    %480 = vmatprep.mubr.bf16.mxu0 0
    %481 = vmatmul.mubr.bf16.gmra.mrb[0].mxu0 %v364
    %v482 = vpop.f32.mrb[0].mxu0
    %v483 = vadd.f32 0.0, %v482
    %v484 = vpop.f32.mrb[0].mxu0
    %v485 = vadd.f32 0.0, %v484
    %v486 = vpop.f32.mrb[0].mxu0
    %v487 = vpop.f32.mrb[0].mxu0
    %488 = vdwg.mxu0
    %489 = vmatprep.subr.bf16.mxu0 %v305
    %490 = vmatpush1.bf16.msra.mxu0 %v304
    %491 = vmatprep.subr.bf16.mxu0 %v313
    %492 = vmatpush1.bf16.msra.mxu0 %v312
    %493 = vmatprep.subr.bf16.mxu0 %v321
    %494 = vmatpush1.bf16.msra.mxu0 %v320
    %495 = vmatprep.subr.bf16.mxu0 %v329
    %496 = vmatpush1.bf16.msra.mxu0 %v328
    %497 = vmatprep.subr.bf16.mxu0 0
    %498 = vmatpush1.bf16.msra.mxu0 0
    %499 = vmatprep.subr.bf16.mxu0 0
    %500 = vmatpush1.bf16.msra.mxu0 0
    %501 = vmatprep.subr.bf16.mxu0 0
    %502 = vmatpush1.bf16.msra.mxu0 0
    %503 = vmatprep.subr.bf16.mxu0 0
    %504 = vmatpush1.bf16.msra.mxu0 0
    %505 = vmatprep.subr.bf16.mxu0 0
    %506 = vmatpush1.bf16.msra.mxu0 0
    %507 = vmatprep.subr.bf16.mxu0 0
    %508 = vmatpush1.bf16.msra.mxu0 0
    %509 = vmatprep.subr.bf16.mxu0 0
    %510 = vmatpush1.bf16.msra.mxu0 0
    %511 = vmatprep.subr.bf16.mxu0 0
    %512 = vmatpush1.bf16.msra.mxu0 0
    %513 = vmatprep.subr.bf16.mxu0 0
    %514 = vmatpush1.bf16.msra.mxu0 0
    %515 = vmatprep.subr.bf16.mxu0 0
    %516 = vmatpush1.bf16.msra.mxu0 0
    %517 = vmatprep.subr.bf16.mxu0 0
    %518 = vmatpush1.bf16.msra.mxu0 0
    %519 = vmatprep.subr.bf16.mxu0 0
    %520 = vmatpush1.bf16.msra.mxu0 0
    %521 = vmatprep.mubr.bf16.mxu0 0
    %522 = vmatmul.mubr.bf16.gmra.mrb[0].mxu0 %v364
    %v523 = vpop.f32.mrb[0].mxu0
    %v524 = vadd.f32 0.0, %v523
    %v525 = vpop.f32.mrb[0].mxu0
    %v526 = vadd.f32 0.0, %v525
    %v527 = vpop.f32.mrb[0].mxu0
    %v528 = vpop.f32.mrb[0].mxu0
    %529 = vdwg.mxu0
    %vm530 = vcmp.ge.f32.partialorder %v401, 0.0
    %vm531 = vcmp.ge.f32.partialorder %v403, 0.0
    %vm532 = vcmp.ge.f32.partialorder %v442, 0.0
    %vm533 = vcmp.ge.f32.partialorder %v444, 0.0
    %vm534 = vcmp.ge.f32.partialorder %v483, 0.0
    %vm535 = vcmp.ge.f32.partialorder %v485, 0.0
    %vm536 = vcmp.ge.f32.partialorder %v524, 0.0
    %vm537 = vcmp.ge.f32.partialorder %v526, 0.0
    %v538 = vmul.f32 %v401, 0.01
    %v539 = vmul.f32 %v403, 0.01
    %v540 = vmul.f32 %v442, 0.01
    %v541 = vmul.f32 %v444, 0.01
    %v542 = vmul.f32 %v483, 0.01
    %v543 = vmul.f32 %v485, 0.01
    %v544 = vmul.f32 %v524, 0.01
    %v545 = vmul.f32 %v526, 0.01
    %v546 = vsel %vm530, %v401, %v538
    %v547 = vsel %vm531, %v403, %v539
    %v548 = vsel %vm532, %v442, %v540
    %v549 = vsel %vm533, %v444, %v541
    %v550 = vsel %vm534, %v483, %v542
    %v551 = vsel %vm535, %v485, %v543
    %v552 = vsel %vm536, %v524, %v544
    %v553 = vsel %vm537, %v526, %v545
    %v554 = vpack.c.bf16 %v546, %v546
    %v555 = vpack.c.bf16 %v547, %v547
    %v556 = vpack.c.bf16 %v548, %v548
    %v557 = vpack.c.bf16 %v549, %v549
    %v558 = vpack.c.bf16 %v550, %v550
    %v559 = vpack.c.bf16 %v551, %v551
    %v560 = vpack.c.bf16 %v552, %v552
    %v561 = vpack.c.bf16 %v553, %v553
    %v562 = vld [vmem:[#allocation5] sm:$0xff]
    %v563 = vld [vmem:[#allocation5 + $0x8] sm:$0xff]
    %v564 = vld [vmem:[#allocation5 + $0x10] sm:$0xff]
    %v565 = vld [vmem:[#allocation5 + $0x18] sm:$0xff]
    %v566 = vld [vmem:[#allocation5 + $0x20] sm:$0xff]
    %v567 = vld [vmem:[#allocation5 + $0x28] sm:$0xff]
    %v568 = vld [vmem:[#allocation5 + $0x30] sm:$0xff]
    %v569 = vld [vmem:[#allocation5 + $0x38] sm:$0xff]
    %v570 = vld [vmem:[#allocation5 + $0x40] sm:$0xff]
    %v571 = vld [vmem:[#allocation5 + $0x48] sm:$0xff]
    %v572 = vld [vmem:[#allocation5 + $0x50] sm:$0xff]
    %v573 = vld [vmem:[#allocation5 + $0x58] sm:$0xff]
    %v574 = vld [vmem:[#allocation5 + $0x60] sm:$0xff]
    %v575 = vld [vmem:[#allocation5 + $0x68] sm:$0xff]
    %v576 = vld [vmem:[#allocation5 + $0x70] sm:$0xff]
    %v577 = vld [vmem:[#allocation5 + $0x78] sm:$0xff]
    %v578 = vld [vmem:[#allocation5 + $0x80] sm:$0xff]
    %v579 = vld [vmem:[#allocation5 + $0x88] sm:$0xff]
    %v580 = vld [vmem:[#allocation5 + $0x90] sm:$0xff]
    %v581 = vld [vmem:[#allocation5 + $0x98] sm:$0xff]
    %v582 = vld [vmem:[#allocation5 + $0xa0] sm:$0xff]
    %v583 = vld [vmem:[#allocation5 + $0xa8] sm:$0xff]
    %v584 = vld [vmem:[#allocation5 + $0xb0] sm:$0xff]
    %v585 = vld [vmem:[#allocation5 + $0xb8] sm:$0xff]
    %v586 = vld [vmem:[#allocation5 + $0xc0] sm:$0xff]
    %v587 = vld [vmem:[#allocation5 + $0xc8] sm:$0xff]
    %v588 = vld [vmem:[#allocation5 + $0xd0] sm:$0xff]
    %v589 = vld [vmem:[#allocation5 + $0xd8] sm:$0xff]
    %v590 = vld [vmem:[#allocation5 + $0xe0] sm:$0xff]
    %v591 = vld [vmem:[#allocation5 + $0xe8] sm:$0xff]
    %v592 = vld [vmem:[#allocation5 + $0xf0] sm:$0xff]
    %v593 = vld [vmem:[#allocation5 + $0xf8] sm:$0xff]
    %v594 = vld [vmem:[#allocation5 + $0x100] sm:$0xff]
    %v595 = vld [vmem:[#allocation5 + $0x108] sm:$0xff]
    %v596 = vld [vmem:[#allocation5 + $0x110] sm:$0xff]
    %v597 = vld [vmem:[#allocation5 + $0x118] sm:$0xff]
    %v598 = vld [vmem:[#allocation5 + $0x120] sm:$0xff]
    %v599 = vld [vmem:[#allocation5 + $0x128] sm:$0xff]
    %v600 = vld [vmem:[#allocation5 + $0x130] sm:$0xff]
    %v601 = vld [vmem:[#allocation5 + $0x138] sm:$0xff]
    %v602 = vld [vmem:[#allocation5 + $0x140] sm:$0xff]
    %v603 = vld [vmem:[#allocation5 + $0x148] sm:$0xff]
    %v604 = vld [vmem:[#allocation5 + $0x150] sm:$0xff]
    %v605 = vld [vmem:[#allocation5 + $0x158] sm:$0xff]
    %v606 = vld [vmem:[#allocation5 + $0x160] sm:$0xff]
    %v607 = vld [vmem:[#allocation5 + $0x168] sm:$0xff]
    %v608 = vld [vmem:[#allocation5 + $0x170] sm:$0xff]
    %v609 = vld [vmem:[#allocation5 + $0x178] sm:$0xff]
    %v610 = vld [vmem:[#allocation5 + $0x180] sm:$0xff]
    %v611 = vld [vmem:[#allocation5 + $0x188] sm:$0xff]
    %v612 = vld [vmem:[#allocation5 + $0x190] sm:$0xff]
    %v613 = vld [vmem:[#allocation5 + $0x198] sm:$0xff]
    %v614 = vld [vmem:[#allocation5 + $0x1a0] sm:$0xff]
    %v615 = vld [vmem:[#allocation5 + $0x1a8] sm:$0xff]
    %v616 = vld [vmem:[#allocation5 + $0x1b0] sm:$0xff]
    %v617 = vld [vmem:[#allocation5 + $0x1b8] sm:$0xff]
    %v618 = vld [vmem:[#allocation5 + $0x1c0] sm:$0xff]
    %v619 = vld [vmem:[#allocation5 + $0x1c8] sm:$0xff]
    %v620 = vld [vmem:[#allocation5 + $0x1d0] sm:$0xff]
    %v621 = vld [vmem:[#allocation5 + $0x1d8] sm:$0xff]
    %v622 = vld [vmem:[#allocation5 + $0x1e0] sm:$0xff]
    %v623 = vld [vmem:[#allocation5 + $0x1e8] sm:$0xff]
    %v624 = vld [vmem:[#allocation5 + $0x1f0] sm:$0xff]
    %v625 = vld [vmem:[#allocation5 + $0x1f8] sm:$0xff]
    %v626 = vld [vmem:[#allocation5 + $0x200] sm:$0xff]
    %v627 = vld [vmem:[#allocation5 + $0x208] sm:$0xff]
    %v628 = vld [vmem:[#allocation5 + $0x210] sm:$0xff]
    %v629 = vld [vmem:[#allocation5 + $0x218] sm:$0xff]
    %v630 = vld [vmem:[#allocation5 + $0x220] sm:$0xff]
    %v631 = vld [vmem:[#allocation5 + $0x228] sm:$0xff]
    %v632 = vld [vmem:[#allocation5 + $0x230] sm:$0xff]
    %v633 = vld [vmem:[#allocation5 + $0x238] sm:$0xff]
    %v634 = vld [vmem:[#allocation5 + $0x240] sm:$0xff]
    %v635 = vld [vmem:[#allocation5 + $0x248] sm:$0xff]
    %v636 = vld [vmem:[#allocation5 + $0x250] sm:$0xff]
    %v637 = vld [vmem:[#allocation5 + $0x258] sm:$0xff]
    %v638 = vld [vmem:[#allocation5 + $0x260] sm:$0xff]
    %v639 = vld [vmem:[#allocation5 + $0x268] sm:$0xff]
    %v640 = vld [vmem:[#allocation5 + $0x270] sm:$0xff]
    %v641 = vld [vmem:[#allocation5 + $0x278] sm:$0xff]
    %v642 = vld [vmem:[#allocation5 + $0x280] sm:$0xff]
    %v643 = vld [vmem:[#allocation5 + $0x288] sm:$0xff]
    %v644 = vld [vmem:[#allocation5 + $0x290] sm:$0xff]
    %v645 = vld [vmem:[#allocation5 + $0x298] sm:$0xff]
    %v646 = vld [vmem:[#allocation5 + $0x2a0] sm:$0xff]
    %v647 = vld [vmem:[#allocation5 + $0x2a8] sm:$0xff]
    %v648 = vld [vmem:[#allocation5 + $0x2b0] sm:$0xff]
    %v649 = vld [vmem:[#allocation5 + $0x2b8] sm:$0xff]
    %v650 = vld [vmem:[#allocation5 + $0x2c0] sm:$0xff]
    %v651 = vld [vmem:[#allocation5 + $0x2c8] sm:$0xff]
    %v652 = vld [vmem:[#allocation5 + $0x2d0] sm:$0xff]
    %v653 = vld [vmem:[#allocation5 + $0x2d8] sm:$0xff]
    %v654 = vld [vmem:[#allocation5 + $0x2e0] sm:$0xff]
    %v655 = vld [vmem:[#allocation5 + $0x2e8] sm:$0xff]
    %v656 = vld [vmem:[#allocation5 + $0x2f0] sm:$0xff]
    %v657 = vld [vmem:[#allocation5 + $0x2f8] sm:$0xff]
    %v658 = vld [vmem:[#allocation5 + $0x300] sm:$0xff]
    %v659 = vld [vmem:[#allocation5 + $0x308] sm:$0xff]
    %v660 = vld [vmem:[#allocation5 + $0x310] sm:$0xff]
    %v661 = vld [vmem:[#allocation5 + $0x318] sm:$0xff]
    %v662 = vld [vmem:[#allocation5 + $0x320] sm:$0xff]
    %v663 = vld [vmem:[#allocation5 + $0x328] sm:$0xff]
    %v664 = vld [vmem:[#allocation5 + $0x330] sm:$0xff]
    %v665 = vld [vmem:[#allocation5 + $0x338] sm:$0xff]
    %v666 = vld [vmem:[#allocation5 + $0x340] sm:$0xff]
    %v667 = vld [vmem:[#allocation5 + $0x348] sm:$0xff]
    %v668 = vld [vmem:[#allocation5 + $0x350] sm:$0xff]
    %v669 = vld [vmem:[#allocation5 + $0x358] sm:$0xff]
    %v670 = vld [vmem:[#allocation5 + $0x360] sm:$0xff]
    %v671 = vld [vmem:[#allocation5 + $0x368] sm:$0xff]
    %v672 = vld [vmem:[#allocation5 + $0x370] sm:$0xff]
    %v673 = vld [vmem:[#allocation5 + $0x378] sm:$0xff]
    %v674 = vld [vmem:[#allocation5 + $0x380] sm:$0xff]
    %v675 = vld [vmem:[#allocation5 + $0x388] sm:$0xff]
    %v676 = vld [vmem:[#allocation5 + $0x390] sm:$0xff]
    %v677 = vld [vmem:[#allocation5 + $0x398] sm:$0xff]
    %v678 = vld [vmem:[#allocation5 + $0x3a0] sm:$0xff]
    %v679 = vld [vmem:[#allocation5 + $0x3a8] sm:$0xff]
    %v680 = vld [vmem:[#allocation5 + $0x3b0] sm:$0xff]
    %v681 = vld [vmem:[#allocation5 + $0x3b8] sm:$0xff]
    %v682 = vld [vmem:[#allocation5 + $0x3c0] sm:$0xff]
    %v683 = vld [vmem:[#allocation5 + $0x3c8] sm:$0xff]
    %v684 = vld [vmem:[#allocation5 + $0x3d0] sm:$0xff]
    %v685 = vld [vmem:[#allocation5 + $0x3d8] sm:$0xff]
    %v686 = vld [vmem:[#allocation5 + $0x3e0] sm:$0xff]
    %v687 = vld [vmem:[#allocation5 + $0x3e8] sm:$0xff]
    %v688 = vld [vmem:[#allocation5 + $0x3f0] sm:$0xff]
    %v689 = vld [vmem:[#allocation5 + $0x3f8] sm:$0xff]
    %v690 = vld [vmem:[#allocation5 + $0x400] sm:$0xff]
    %v691 = vld [vmem:[#allocation5 + $0x408] sm:$0xff]
    %v692 = vld [vmem:[#allocation5 + $0x410] sm:$0xff]
    %v693 = vld [vmem:[#allocation5 + $0x418] sm:$0xff]
    %v694 = vld [vmem:[#allocation5 + $0x420] sm:$0xff]
    %v695 = vld [vmem:[#allocation5 + $0x428] sm:$0xff]
    %v696 = vld [vmem:[#allocation5 + $0x430] sm:$0xff]
    %v697 = vld [vmem:[#allocation5 + $0x438] sm:$0xff]
    %v698 = vld [vmem:[#allocation5 + $0x440] sm:$0xff]
    %v699 = vld [vmem:[#allocation5 + $0x448] sm:$0xff]
    %v700 = vld [vmem:[#allocation5 + $0x450] sm:$0xff]
    %v701 = vld [vmem:[#allocation5 + $0x458] sm:$0xff]
    %v702 = vld [vmem:[#allocation5 + $0x460] sm:$0xff]
    %v703 = vld [vmem:[#allocation5 + $0x468] sm:$0xff]
    %v704 = vld [vmem:[#allocation5 + $0x470] sm:$0xff]
    %v705 = vld [vmem:[#allocation5 + $0x478] sm:$0xff]
    %v706 = vld [vmem:[#allocation5 + $0x480] sm:$0xff]
    %v707 = vld [vmem:[#allocation5 + $0x488] sm:$0xff]
    %v708 = vld [vmem:[#allocation5 + $0x490] sm:$0xff]
    %v709 = vld [vmem:[#allocation5 + $0x498] sm:$0xff]
    %v710 = vld [vmem:[#allocation5 + $0x4a0] sm:$0xff]
    %v711 = vld [vmem:[#allocation5 + $0x4a8] sm:$0xff]
    %v712 = vld [vmem:[#allocation5 + $0x4b0] sm:$0xff]
    %v713 = vld [vmem:[#allocation5 + $0x4b8] sm:$0xff]
    %v714 = vld [vmem:[#allocation5 + $0x4c0] sm:$0xff]
    %v715 = vld [vmem:[#allocation5 + $0x4c8] sm:$0xff]
    %v716 = vld [vmem:[#allocation5 + $0x4d0] sm:$0xff]
    %v717 = vld [vmem:[#allocation5 + $0x4d8] sm:$0xff]
    %v718 = vld [vmem:[#allocation5 + $0x4e0] sm:$0xff]
    %v719 = vld [vmem:[#allocation5 + $0x4e8] sm:$0xff]
    %v720 = vld [vmem:[#allocation5 + $0x4f0] sm:$0xff]
    %v721 = vld [vmem:[#allocation5 + $0x4f8] sm:$0xff]
    %v722 = vld [vmem:[#allocation5 + $0x500] sm:$0xff]
    %v723 = vld [vmem:[#allocation5 + $0x508] sm:$0xff]
    %v724 = vld [vmem:[#allocation5 + $0x510] sm:$0xff]
    %v725 = vld [vmem:[#allocation5 + $0x518] sm:$0xff]
    %v726 = vld [vmem:[#allocation5 + $0x520] sm:$0xff]
    %v727 = vld [vmem:[#allocation5 + $0x528] sm:$0xff]
    %v728 = vld [vmem:[#allocation5 + $0x530] sm:$0xff]
    %v729 = vld [vmem:[#allocation5 + $0x538] sm:$0xff]
    %v730 = vld [vmem:[#allocation5 + $0x540] sm:$0xff]
    %v731 = vld [vmem:[#allocation5 + $0x548] sm:$0xff]
    %v732 = vld [vmem:[#allocation5 + $0x550] sm:$0xff]
    %v733 = vld [vmem:[#allocation5 + $0x558] sm:$0xff]
    %v734 = vld [vmem:[#allocation5 + $0x560] sm:$0xff]
    %v735 = vld [vmem:[#allocation5 + $0x568] sm:$0xff]
    %v736 = vld [vmem:[#allocation5 + $0x570] sm:$0xff]
    %v737 = vld [vmem:[#allocation5 + $0x578] sm:$0xff]
    %v738 = vld [vmem:[#allocation5 + $0x580] sm:$0xff]
    %v739 = vld [vmem:[#allocation5 + $0x588] sm:$0xff]
    %v740 = vld [vmem:[#allocation5 + $0x590] sm:$0xff]
    %v741 = vld [vmem:[#allocation5 + $0x598] sm:$0xff]
    %v742 = vld [vmem:[#allocation5 + $0x5a0] sm:$0xff]
    %v743 = vld [vmem:[#allocation5 + $0x5a8] sm:$0xff]
    %v744 = vld [vmem:[#allocation5 + $0x5b0] sm:$0xff]
    %v745 = vld [vmem:[#allocation5 + $0x5b8] sm:$0xff]
    %v746 = vld [vmem:[#allocation5 + $0x5c0] sm:$0xff]
    %v747 = vld [vmem:[#allocation5 + $0x5c8] sm:$0xff]
    %v748 = vld [vmem:[#allocation5 + $0x5d0] sm:$0xff]
    %v749 = vld [vmem:[#allocation5 + $0x5d8] sm:$0xff]
    %v750 = vld [vmem:[#allocation5 + $0x5e0] sm:$0xff]
    %v751 = vld [vmem:[#allocation5 + $0x5e8] sm:$0xff]
    %v752 = vld [vmem:[#allocation5 + $0x5f0] sm:$0xff]
    %v753 = vld [vmem:[#allocation5 + $0x5f8] sm:$0xff]
    %v754 = vld [vmem:[#allocation5 + $0x600] sm:$0xff]
    %v755 = vld [vmem:[#allocation5 + $0x608] sm:$0xff]
    %v756 = vld [vmem:[#allocation5 + $0x610] sm:$0xff]
    %v757 = vld [vmem:[#allocation5 + $0x618] sm:$0xff]
    %v758 = vld [vmem:[#allocation5 + $0x620] sm:$0xff]
    %v759 = vld [vmem:[#allocation5 + $0x628] sm:$0xff]
    %v760 = vld [vmem:[#allocation5 + $0x630] sm:$0xff]
    %v761 = vld [vmem:[#allocation5 + $0x638] sm:$0xff]
    %v762 = vld [vmem:[#allocation5 + $0x640] sm:$0xff]
    %v763 = vld [vmem:[#allocation5 + $0x648] sm:$0xff]
    %v764 = vld [vmem:[#allocation5 + $0x650] sm:$0xff]
    %v765 = vld [vmem:[#allocation5 + $0x658] sm:$0xff]
    %v766 = vld [vmem:[#allocation5 + $0x660] sm:$0xff]
    %v767 = vld [vmem:[#allocation5 + $0x668] sm:$0xff]
    %v768 = vld [vmem:[#allocation5 + $0x670] sm:$0xff]
    %v769 = vld [vmem:[#allocation5 + $0x678] sm:$0xff]
    %v770 = vld [vmem:[#allocation5 + $0x680] sm:$0xff]
    %v771 = vld [vmem:[#allocation5 + $0x688] sm:$0xff]
    %v772 = vld [vmem:[#allocation5 + $0x690] sm:$0xff]
    %v773 = vld [vmem:[#allocation5 + $0x698] sm:$0xff]
    %v774 = vld [vmem:[#allocation5 + $0x6a0] sm:$0xff]
    %v775 = vld [vmem:[#allocation5 + $0x6a8] sm:$0xff]
    %v776 = vld [vmem:[#allocation5 + $0x6b0] sm:$0xff]
    %v777 = vld [vmem:[#allocation5 + $0x6b8] sm:$0xff]
    %v778 = vld [vmem:[#allocation5 + $0x6c0] sm:$0xff]
    %v779 = vld [vmem:[#allocation5 + $0x6c8] sm:$0xff]
    %v780 = vld [vmem:[#allocation5 + $0x6d0] sm:$0xff]
    %v781 = vld [vmem:[#allocation5 + $0x6d8] sm:$0xff]
    %v782 = vld [vmem:[#allocation5 + $0x6e0] sm:$0xff]
    %v783 = vld [vmem:[#allocation5 + $0x6e8] sm:$0xff]
    %v784 = vld [vmem:[#allocation5 + $0x6f0] sm:$0xff]
    %v785 = vld [vmem:[#allocation5 + $0x6f8] sm:$0xff]
    %v786 = vld [vmem:[#allocation5 + $0x700] sm:$0xff]
    %v787 = vld [vmem:[#allocation5 + $0x708] sm:$0xff]
    %v788 = vld [vmem:[#allocation5 + $0x710] sm:$0xff]
    %v789 = vld [vmem:[#allocation5 + $0x718] sm:$0xff]
    %v790 = vld [vmem:[#allocation5 + $0x720] sm:$0xff]
    %v791 = vld [vmem:[#allocation5 + $0x728] sm:$0xff]
    %v792 = vld [vmem:[#allocation5 + $0x730] sm:$0xff]
    %v793 = vld [vmem:[#allocation5 + $0x738] sm:$0xff]
    %v794 = vld [vmem:[#allocation5 + $0x740] sm:$0xff]
    %v795 = vld [vmem:[#allocation5 + $0x748] sm:$0xff]
    %v796 = vld [vmem:[#allocation5 + $0x750] sm:$0xff]
    %v797 = vld [vmem:[#allocation5 + $0x758] sm:$0xff]
    %v798 = vld [vmem:[#allocation5 + $0x760] sm:$0xff]
    %v799 = vld [vmem:[#allocation5 + $0x768] sm:$0xff]
    %v800 = vld [vmem:[#allocation5 + $0x770] sm:$0xff]
    %v801 = vld [vmem:[#allocation5 + $0x778] sm:$0xff]
    %v802 = vld [vmem:[#allocation5 + $0x780] sm:$0xff]
    %v803 = vld [vmem:[#allocation5 + $0x788] sm:$0xff]
    %v804 = vld [vmem:[#allocation5 + $0x790] sm:$0xff]
    %v805 = vld [vmem:[#allocation5 + $0x798] sm:$0xff]
    %v806 = vld [vmem:[#allocation5 + $0x7a0] sm:$0xff]
    %v807 = vld [vmem:[#allocation5 + $0x7a8] sm:$0xff]
    %v808 = vld [vmem:[#allocation5 + $0x7b0] sm:$0xff]
    %v809 = vld [vmem:[#allocation5 + $0x7b8] sm:$0xff]
    %v810 = vld [vmem:[#allocation5 + $0x7c0] sm:$0xff]
    %v811 = vld [vmem:[#allocation5 + $0x7c8] sm:$0xff]
    %v812 = vld [vmem:[#allocation5 + $0x7d0] sm:$0xff]
    %v813 = vld [vmem:[#allocation5 + $0x7d8] sm:$0xff]
    %v814 = vld [vmem:[#allocation5 + $0x7e0] sm:$0xff]
    %v815 = vld [vmem:[#allocation5 + $0x7e8] sm:$0xff]
    %v816 = vld [vmem:[#allocation5 + $0x7f0] sm:$0xff]
    %v817 = vld [vmem:[#allocation5 + $0x7f8] sm:$0xff]
    %v1074 = vunpack.c.l.b16 %v562
    %v1075 = vunpack.c.h.b16 %v562
    %v1076 = vunpack.c.l.b16 %v563
    %v1077 = vunpack.c.h.b16 %v563
    %v1078 = vunpack.c.l.b16 %v564
    %v1079 = vunpack.c.h.b16 %v564
    %v1080 = vunpack.c.l.b16 %v565
    %v1081 = vunpack.c.h.b16 %v565
    %v1082 = vunpack.c.l.b16 %v566
    %v1083 = vunpack.c.h.b16 %v566
    %v1084 = vunpack.c.l.b16 %v567
    %v1085 = vunpack.c.h.b16 %v567
    %v1086 = vunpack.c.l.b16 %v568
    %v1087 = vunpack.c.h.b16 %v568
    %v1088 = vunpack.c.l.b16 %v569
    %v1089 = vunpack.c.h.b16 %v569
    %v1090 = vunpack.c.l.b16 %v570
    %v1091 = vunpack.c.h.b16 %v570
    %v1092 = vunpack.c.l.b16 %v571
    %v1093 = vunpack.c.h.b16 %v571
    %v1094 = vunpack.c.l.b16 %v572
    %v1095 = vunpack.c.h.b16 %v572
    %v1096 = vunpack.c.l.b16 %v573
    %v1097 = vunpack.c.h.b16 %v573
    %v1098 = vunpack.c.l.b16 %v574
    %v1099 = vunpack.c.h.b16 %v574
    %v1100 = vunpack.c.l.b16 %v575
    %v1101 = vunpack.c.h.b16 %v575
    %v1102 = vunpack.c.l.b16 %v576
    %v1103 = vunpack.c.h.b16 %v576
    %v1104 = vunpack.c.l.b16 %v577
    %v1105 = vunpack.c.h.b16 %v577
    %v1106 = vunpack.c.l.b16 %v578
    %v1107 = vunpack.c.h.b16 %v578
    %v1108 = vunpack.c.l.b16 %v579
    %v1109 = vunpack.c.h.b16 %v579
    %v1110 = vunpack.c.l.b16 %v580
    %v1111 = vunpack.c.h.b16 %v580
    %v1112 = vunpack.c.l.b16 %v581
    %v1113 = vunpack.c.h.b16 %v581
    %v1114 = vunpack.c.l.b16 %v582
    %v1115 = vunpack.c.h.b16 %v582
    %v1116 = vunpack.c.l.b16 %v583
    %v1117 = vunpack.c.h.b16 %v583
    %v1118 = vunpack.c.l.b16 %v584
    %v1119 = vunpack.c.h.b16 %v584
    %v1120 = vunpack.c.l.b16 %v585
    %v1121 = vunpack.c.h.b16 %v585
    %v1122 = vunpack.c.l.b16 %v586
    %v1123 = vunpack.c.h.b16 %v586
    %v1124 = vunpack.c.l.b16 %v587
    %v1125 = vunpack.c.h.b16 %v587
    %v1126 = vunpack.c.l.b16 %v588
    %v1127 = vunpack.c.h.b16 %v588
    %v1128 = vunpack.c.l.b16 %v589
    %v1129 = vunpack.c.h.b16 %v589
    %v1130 = vunpack.c.l.b16 %v590
    %v1131 = vunpack.c.h.b16 %v590
    %v1132 = vunpack.c.l.b16 %v591
    %v1133 = vunpack.c.h.b16 %v591
    %v1134 = vunpack.c.l.b16 %v592
    %v1135 = vunpack.c.h.b16 %v592
    %v1136 = vunpack.c.l.b16 %v593
    %v1137 = vunpack.c.h.b16 %v593
    %v1138 = vunpack.c.l.b16 %v594
    %v1139 = vunpack.c.h.b16 %v594
    %v1140 = vunpack.c.l.b16 %v595
    %v1141 = vunpack.c.h.b16 %v595
    %v1142 = vunpack.c.l.b16 %v596
    %v1143 = vunpack.c.h.b16 %v596
    %v1144 = vunpack.c.l.b16 %v597
    %v1145 = vunpack.c.h.b16 %v597
    %v1146 = vunpack.c.l.b16 %v598
    %v1147 = vunpack.c.h.b16 %v598
    %v1148 = vunpack.c.l.b16 %v599
    %v1149 = vunpack.c.h.b16 %v599
    %v1150 = vunpack.c.l.b16 %v600
    %v1151 = vunpack.c.h.b16 %v600
    %v1152 = vunpack.c.l.b16 %v601
    %v1153 = vunpack.c.h.b16 %v601
    %v1154 = vunpack.c.l.b16 %v602
    %v1155 = vunpack.c.h.b16 %v602
    %v1156 = vunpack.c.l.b16 %v603
    %v1157 = vunpack.c.h.b16 %v603
    %v1158 = vunpack.c.l.b16 %v604
    %v1159 = vunpack.c.h.b16 %v604
    %v1160 = vunpack.c.l.b16 %v605
    %v1161 = vunpack.c.h.b16 %v605
    %v1162 = vunpack.c.l.b16 %v606
    %v1163 = vunpack.c.h.b16 %v606
    %v1164 = vunpack.c.l.b16 %v607
    %v1165 = vunpack.c.h.b16 %v607
    %v1166 = vunpack.c.l.b16 %v608
    %v1167 = vunpack.c.h.b16 %v608
    %v1168 = vunpack.c.l.b16 %v609
    %v1169 = vunpack.c.h.b16 %v609
    %v1170 = vunpack.c.l.b16 %v610
    %v1171 = vunpack.c.h.b16 %v610
    %v1172 = vunpack.c.l.b16 %v611
    %v1173 = vunpack.c.h.b16 %v611
    %v1174 = vunpack.c.l.b16 %v612
    %v1175 = vunpack.c.h.b16 %v612
    %v1176 = vunpack.c.l.b16 %v613
    %v1177 = vunpack.c.h.b16 %v613
    %v1178 = vunpack.c.l.b16 %v614
    %v1179 = vunpack.c.h.b16 %v614
    %v1180 = vunpack.c.l.b16 %v615
    %v1181 = vunpack.c.h.b16 %v615
    %v1182 = vunpack.c.l.b16 %v616
    %v1183 = vunpack.c.h.b16 %v616
    %v1184 = vunpack.c.l.b16 %v617
    %v1185 = vunpack.c.h.b16 %v617
    %v1186 = vunpack.c.l.b16 %v618
    %v1187 = vunpack.c.h.b16 %v618
    %v1188 = vunpack.c.l.b16 %v619
    %v1189 = vunpack.c.h.b16 %v619
    %v1190 = vunpack.c.l.b16 %v620
    %v1191 = vunpack.c.h.b16 %v620
    %v1192 = vunpack.c.l.b16 %v621
    %v1193 = vunpack.c.h.b16 %v621
    %v1194 = vunpack.c.l.b16 %v622
    %v1195 = vunpack.c.h.b16 %v622
    %v1196 = vunpack.c.l.b16 %v623
    %v1197 = vunpack.c.h.b16 %v623
    %v1198 = vunpack.c.l.b16 %v624
    %v1199 = vunpack.c.h.b16 %v624
    %v1200 = vunpack.c.l.b16 %v625
    %v1201 = vunpack.c.h.b16 %v625
    %v1202 = vunpack.c.l.b16 %v626
    %v1203 = vunpack.c.h.b16 %v626
    %v1204 = vunpack.c.l.b16 %v627
    %v1205 = vunpack.c.h.b16 %v627
    %v1206 = vunpack.c.l.b16 %v628
    %v1207 = vunpack.c.h.b16 %v628
    %v1208 = vunpack.c.l.b16 %v629
    %v1209 = vunpack.c.h.b16 %v629
    %v1210 = vunpack.c.l.b16 %v630
    %v1211 = vunpack.c.h.b16 %v630
    %v1212 = vunpack.c.l.b16 %v631
    %v1213 = vunpack.c.h.b16 %v631
    %v1214 = vunpack.c.l.b16 %v632
    %v1215 = vunpack.c.h.b16 %v632
    %v1216 = vunpack.c.l.b16 %v633
    %v1217 = vunpack.c.h.b16 %v633
    %v1218 = vunpack.c.l.b16 %v634
    %v1219 = vunpack.c.h.b16 %v634
    %v1220 = vunpack.c.l.b16 %v635
    %v1221 = vunpack.c.h.b16 %v635
    %v1222 = vunpack.c.l.b16 %v636
    %v1223 = vunpack.c.h.b16 %v636
    %v1224 = vunpack.c.l.b16 %v637
    %v1225 = vunpack.c.h.b16 %v637
    %v1226 = vunpack.c.l.b16 %v638
    %v1227 = vunpack.c.h.b16 %v638
    %v1228 = vunpack.c.l.b16 %v639
    %v1229 = vunpack.c.h.b16 %v639
    %v1230 = vunpack.c.l.b16 %v640
    %v1231 = vunpack.c.h.b16 %v640
    %v1232 = vunpack.c.l.b16 %v641
    %v1233 = vunpack.c.h.b16 %v641
    %v1234 = vunpack.c.l.b16 %v642
    %v1235 = vunpack.c.h.b16 %v642
    %v1236 = vunpack.c.l.b16 %v643
    %v1237 = vunpack.c.h.b16 %v643
    %v1238 = vunpack.c.l.b16 %v644
    %v1239 = vunpack.c.h.b16 %v644
    %v1240 = vunpack.c.l.b16 %v645
    %v1241 = vunpack.c.h.b16 %v645
    %v1242 = vunpack.c.l.b16 %v646
    %v1243 = vunpack.c.h.b16 %v646
    %v1244 = vunpack.c.l.b16 %v647
    %v1245 = vunpack.c.h.b16 %v647
    %v1246 = vunpack.c.l.b16 %v648
    %v1247 = vunpack.c.h.b16 %v648
    %v1248 = vunpack.c.l.b16 %v649
    %v1249 = vunpack.c.h.b16 %v649
    %v1250 = vunpack.c.l.b16 %v650
    %v1251 = vunpack.c.h.b16 %v650
    %v1252 = vunpack.c.l.b16 %v651
    %v1253 = vunpack.c.h.b16 %v651
    %v1254 = vunpack.c.l.b16 %v652
    %v1255 = vunpack.c.h.b16 %v652
    %v1256 = vunpack.c.l.b16 %v653
    %v1257 = vunpack.c.h.b16 %v653
    %v1258 = vunpack.c.l.b16 %v654
    %v1259 = vunpack.c.h.b16 %v654
    %v1260 = vunpack.c.l.b16 %v655
    %v1261 = vunpack.c.h.b16 %v655
    %v1262 = vunpack.c.l.b16 %v656
    %v1263 = vunpack.c.h.b16 %v656
    %v1264 = vunpack.c.l.b16 %v657
    %v1265 = vunpack.c.h.b16 %v657
    %v1266 = vunpack.c.l.b16 %v658
    %v1267 = vunpack.c.h.b16 %v658
    %v1268 = vunpack.c.l.b16 %v659
    %v1269 = vunpack.c.h.b16 %v659
    %v1270 = vunpack.c.l.b16 %v660
    %v1271 = vunpack.c.h.b16 %v660
    %v1272 = vunpack.c.l.b16 %v661
    %v1273 = vunpack.c.h.b16 %v661
    %v1274 = vunpack.c.l.b16 %v662
    %v1275 = vunpack.c.h.b16 %v662
    %v1276 = vunpack.c.l.b16 %v663
    %v1277 = vunpack.c.h.b16 %v663
    %v1278 = vunpack.c.l.b16 %v664
    %v1279 = vunpack.c.h.b16 %v664
    %v1280 = vunpack.c.l.b16 %v665
    %v1281 = vunpack.c.h.b16 %v665
    %v1282 = vunpack.c.l.b16 %v666
    %v1283 = vunpack.c.h.b16 %v666
    %v1284 = vunpack.c.l.b16 %v667
    %v1285 = vunpack.c.h.b16 %v667
    %v1286 = vunpack.c.l.b16 %v668
    %v1287 = vunpack.c.h.b16 %v668
    %v1288 = vunpack.c.l.b16 %v669
    %v1289 = vunpack.c.h.b16 %v669
    %v1290 = vunpack.c.l.b16 %v670
    %v1291 = vunpack.c.h.b16 %v670
    %v1292 = vunpack.c.l.b16 %v671
    %v1293 = vunpack.c.h.b16 %v671
    %v1294 = vunpack.c.l.b16 %v672
    %v1295 = vunpack.c.h.b16 %v672
    %v1296 = vunpack.c.l.b16 %v673
    %v1297 = vunpack.c.h.b16 %v673
    %v1298 = vunpack.c.l.b16 %v674
    %v1299 = vunpack.c.h.b16 %v674
    %v1300 = vunpack.c.l.b16 %v675
    %v1301 = vunpack.c.h.b16 %v675
    %v1302 = vunpack.c.l.b16 %v676
    %v1303 = vunpack.c.h.b16 %v676
    %v1304 = vunpack.c.l.b16 %v677
    %v1305 = vunpack.c.h.b16 %v677
    %v1306 = vunpack.c.l.b16 %v678
    %v1307 = vunpack.c.h.b16 %v678
    %v1308 = vunpack.c.l.b16 %v679
    %v1309 = vunpack.c.h.b16 %v679
    %v1310 = vunpack.c.l.b16 %v680
    %v1311 = vunpack.c.h.b16 %v680
    %v1312 = vunpack.c.l.b16 %v681
    %v1313 = vunpack.c.h.b16 %v681
    %v1314 = vunpack.c.l.b16 %v682
    %v1315 = vunpack.c.h.b16 %v682
    %v1316 = vunpack.c.l.b16 %v683
    %v1317 = vunpack.c.h.b16 %v683
    %v1318 = vunpack.c.l.b16 %v684
    %v1319 = vunpack.c.h.b16 %v684
    %v1320 = vunpack.c.l.b16 %v685
    %v1321 = vunpack.c.h.b16 %v685
    %v1322 = vunpack.c.l.b16 %v686
    %v1323 = vunpack.c.h.b16 %v686
    %v1324 = vunpack.c.l.b16 %v687
    %v1325 = vunpack.c.h.b16 %v687
    %v1326 = vunpack.c.l.b16 %v688
    %v1327 = vunpack.c.h.b16 %v688
    %v1328 = vunpack.c.l.b16 %v689
    %v1329 = vunpack.c.h.b16 %v689
    %v1330 = vunpack.c.l.b16 %v690
    %v1331 = vunpack.c.h.b16 %v690
    %v1332 = vunpack.c.l.b16 %v691
    %v1333 = vunpack.c.h.b16 %v691
    %v1334 = vunpack.c.l.b16 %v692
    %v1335 = vunpack.c.h.b16 %v692
    %v1336 = vunpack.c.l.b16 %v693
    %v1337 = vunpack.c.h.b16 %v693
    %v1338 = vunpack.c.l.b16 %v694
    %v1339 = vunpack.c.h.b16 %v694
    %v1340 = vunpack.c.l.b16 %v695
    %v1341 = vunpack.c.h.b16 %v695
    %v1342 = vunpack.c.l.b16 %v696
    %v1343 = vunpack.c.h.b16 %v696
    %v1344 = vunpack.c.l.b16 %v697
    %v1345 = vunpack.c.h.b16 %v697
    %v1346 = vunpack.c.l.b16 %v698
    %v1347 = vunpack.c.h.b16 %v698
    %v1348 = vunpack.c.l.b16 %v699
    %v1349 = vunpack.c.h.b16 %v699
    %v1350 = vunpack.c.l.b16 %v700
    %v1351 = vunpack.c.h.b16 %v700
    %v1352 = vunpack.c.l.b16 %v701
    %v1353 = vunpack.c.h.b16 %v701
    %v1354 = vunpack.c.l.b16 %v702
    %v1355 = vunpack.c.h.b16 %v702
    %v1356 = vunpack.c.l.b16 %v703
    %v1357 = vunpack.c.h.b16 %v703
    %v1358 = vunpack.c.l.b16 %v704
    %v1359 = vunpack.c.h.b16 %v704
    %v1360 = vunpack.c.l.b16 %v705
    %v1361 = vunpack.c.h.b16 %v705
    %v1362 = vunpack.c.l.b16 %v706
    %v1363 = vunpack.c.h.b16 %v706
    %v1364 = vunpack.c.l.b16 %v707
    %v1365 = vunpack.c.h.b16 %v707
    %v1366 = vunpack.c.l.b16 %v708
    %v1367 = vunpack.c.h.b16 %v708
    %v1368 = vunpack.c.l.b16 %v709
    %v1369 = vunpack.c.h.b16 %v709
    %v1370 = vunpack.c.l.b16 %v710
    %v1371 = vunpack.c.h.b16 %v710
    %v1372 = vunpack.c.l.b16 %v711
    %v1373 = vunpack.c.h.b16 %v711
    %v1374 = vunpack.c.l.b16 %v712
    %v1375 = vunpack.c.h.b16 %v712
    %v1376 = vunpack.c.l.b16 %v713
    %v1377 = vunpack.c.h.b16 %v713
    %v1378 = vunpack.c.l.b16 %v714
    %v1379 = vunpack.c.h.b16 %v714
    %v1380 = vunpack.c.l.b16 %v715
    %v1381 = vunpack.c.h.b16 %v715
    %v1382 = vunpack.c.l.b16 %v716
    %v1383 = vunpack.c.h.b16 %v716
    %v1384 = vunpack.c.l.b16 %v717
    %v1385 = vunpack.c.h.b16 %v717
    %v1386 = vunpack.c.l.b16 %v718
    %v1387 = vunpack.c.h.b16 %v718
    %v1388 = vunpack.c.l.b16 %v719
    %v1389 = vunpack.c.h.b16 %v719
    %v1390 = vunpack.c.l.b16 %v720
    %v1391 = vunpack.c.h.b16 %v720
    %v1392 = vunpack.c.l.b16 %v721
    %v1393 = vunpack.c.h.b16 %v721
    %v1394 = vunpack.c.l.b16 %v722
    %v1395 = vunpack.c.h.b16 %v722
    %v1396 = vunpack.c.l.b16 %v723
    %v1397 = vunpack.c.h.b16 %v723
    %v1398 = vunpack.c.l.b16 %v724
    %v1399 = vunpack.c.h.b16 %v724
    %v1400 = vunpack.c.l.b16 %v725
    %v1401 = vunpack.c.h.b16 %v725
    %v1402 = vunpack.c.l.b16 %v726
    %v1403 = vunpack.c.h.b16 %v726
    %v1404 = vunpack.c.l.b16 %v727
    %v1405 = vunpack.c.h.b16 %v727
    %v1406 = vunpack.c.l.b16 %v728
    %v1407 = vunpack.c.h.b16 %v728
    %v1408 = vunpack.c.l.b16 %v729
    %v1409 = vunpack.c.h.b16 %v729
    %v1410 = vunpack.c.l.b16 %v730
    %v1411 = vunpack.c.h.b16 %v730
    %v1412 = vunpack.c.l.b16 %v731
    %v1413 = vunpack.c.h.b16 %v731
    %v1414 = vunpack.c.l.b16 %v732
    %v1415 = vunpack.c.h.b16 %v732
    %v1416 = vunpack.c.l.b16 %v733
    %v1417 = vunpack.c.h.b16 %v733
    %v1418 = vunpack.c.l.b16 %v734
    %v1419 = vunpack.c.h.b16 %v734
    %v1420 = vunpack.c.l.b16 %v735
    %v1421 = vunpack.c.h.b16 %v735
    %v1422 = vunpack.c.l.b16 %v736
    %v1423 = vunpack.c.h.b16 %v736
    %v1424 = vunpack.c.l.b16 %v737
    %v1425 = vunpack.c.h.b16 %v737
    %v1426 = vunpack.c.l.b16 %v738
    %v1427 = vunpack.c.h.b16 %v738
    %v1428 = vunpack.c.l.b16 %v739
    %v1429 = vunpack.c.h.b16 %v739
    %v1430 = vunpack.c.l.b16 %v740
    %v1431 = vunpack.c.h.b16 %v740
    %v1432 = vunpack.c.l.b16 %v741
    %v1433 = vunpack.c.h.b16 %v741
    %v1434 = vunpack.c.l.b16 %v742
    %v1435 = vunpack.c.h.b16 %v742
    %v1436 = vunpack.c.l.b16 %v743
    %v1437 = vunpack.c.h.b16 %v743
    %v1438 = vunpack.c.l.b16 %v744
    %v1439 = vunpack.c.h.b16 %v744
    %v1440 = vunpack.c.l.b16 %v745
    %v1441 = vunpack.c.h.b16 %v745
    %v1442 = vunpack.c.l.b16 %v746
    %v1443 = vunpack.c.h.b16 %v746
    %v1444 = vunpack.c.l.b16 %v747
    %v1445 = vunpack.c.h.b16 %v747
    %v1446 = vunpack.c.l.b16 %v748
    %v1447 = vunpack.c.h.b16 %v748
    %v1448 = vunpack.c.l.b16 %v749
    %v1449 = vunpack.c.h.b16 %v749
    %v1450 = vunpack.c.l.b16 %v750
    %v1451 = vunpack.c.h.b16 %v750
    %v1452 = vunpack.c.l.b16 %v751
    %v1453 = vunpack.c.h.b16 %v751
    %v1454 = vunpack.c.l.b16 %v752
    %v1455 = vunpack.c.h.b16 %v752
    %v1456 = vunpack.c.l.b16 %v753
    %v1457 = vunpack.c.h.b16 %v753
    %v1458 = vunpack.c.l.b16 %v754
    %v1459 = vunpack.c.h.b16 %v754
    %v1460 = vunpack.c.l.b16 %v755
    %v1461 = vunpack.c.h.b16 %v755
    %v1462 = vunpack.c.l.b16 %v756
    %v1463 = vunpack.c.h.b16 %v756
    %v1464 = vunpack.c.l.b16 %v757
    %v1465 = vunpack.c.h.b16 %v757
    %v1466 = vunpack.c.l.b16 %v758
    %v1467 = vunpack.c.h.b16 %v758
    %v1468 = vunpack.c.l.b16 %v759
    %v1469 = vunpack.c.h.b16 %v759
    %v1470 = vunpack.c.l.b16 %v760
    %v1471 = vunpack.c.h.b16 %v760
    %v1472 = vunpack.c.l.b16 %v761
    %v1473 = vunpack.c.h.b16 %v761
    %v1474 = vunpack.c.l.b16 %v762
    %v1475 = vunpack.c.h.b16 %v762
    %v1476 = vunpack.c.l.b16 %v763
    %v1477 = vunpack.c.h.b16 %v763
    %v1478 = vunpack.c.l.b16 %v764
    %v1479 = vunpack.c.h.b16 %v764
    %v1480 = vunpack.c.l.b16 %v765
    %v1481 = vunpack.c.h.b16 %v765
    %v1482 = vunpack.c.l.b16 %v766
    %v1483 = vunpack.c.h.b16 %v766
    %v1484 = vunpack.c.l.b16 %v767
    %v1485 = vunpack.c.h.b16 %v767
    %v1486 = vunpack.c.l.b16 %v768
    %v1487 = vunpack.c.h.b16 %v768
    %v1488 = vunpack.c.l.b16 %v769
    %v1489 = vunpack.c.h.b16 %v769
    %v1490 = vunpack.c.l.b16 %v770
    %v1491 = vunpack.c.h.b16 %v770
    %v1492 = vunpack.c.l.b16 %v771
    %v1493 = vunpack.c.h.b16 %v771
    %v1494 = vunpack.c.l.b16 %v772
    %v1495 = vunpack.c.h.b16 %v772
    %v1496 = vunpack.c.l.b16 %v773
    %v1497 = vunpack.c.h.b16 %v773
    %v1498 = vunpack.c.l.b16 %v774
    %v1499 = vunpack.c.h.b16 %v774
    %v1500 = vunpack.c.l.b16 %v775
    %v1501 = vunpack.c.h.b16 %v775
    %v1502 = vunpack.c.l.b16 %v776
    %v1503 = vunpack.c.h.b16 %v776
    %v1504 = vunpack.c.l.b16 %v777
    %v1505 = vunpack.c.h.b16 %v777
    %v1506 = vunpack.c.l.b16 %v778
    %v1507 = vunpack.c.h.b16 %v778
    %v1508 = vunpack.c.l.b16 %v779
    %v1509 = vunpack.c.h.b16 %v779
    %v1510 = vunpack.c.l.b16 %v780
    %v1511 = vunpack.c.h.b16 %v780
    %v1512 = vunpack.c.l.b16 %v781
    %v1513 = vunpack.c.h.b16 %v781
    %v1514 = vunpack.c.l.b16 %v782
    %v1515 = vunpack.c.h.b16 %v782
    %v1516 = vunpack.c.l.b16 %v783
    %v1517 = vunpack.c.h.b16 %v783
    %v1518 = vunpack.c.l.b16 %v784
    %v1519 = vunpack.c.h.b16 %v784
    %v1520 = vunpack.c.l.b16 %v785
    %v1521 = vunpack.c.h.b16 %v785
    %v1522 = vunpack.c.l.b16 %v786
    %v1523 = vunpack.c.h.b16 %v786
    %v1524 = vunpack.c.l.b16 %v787
    %v1525 = vunpack.c.h.b16 %v787
    %v1526 = vunpack.c.l.b16 %v788
    %v1527 = vunpack.c.h.b16 %v788
    %v1528 = vunpack.c.l.b16 %v789
    %v1529 = vunpack.c.h.b16 %v789
    %v1530 = vunpack.c.l.b16 %v790
    %v1531 = vunpack.c.h.b16 %v790
    %v1532 = vunpack.c.l.b16 %v791
    %v1533 = vunpack.c.h.b16 %v791
    %v1534 = vunpack.c.l.b16 %v792
    %v1535 = vunpack.c.h.b16 %v792
    %v1536 = vunpack.c.l.b16 %v793
    %v1537 = vunpack.c.h.b16 %v793
    %v1538 = vunpack.c.l.b16 %v794
    %v1539 = vunpack.c.h.b16 %v794
    %v1540 = vunpack.c.l.b16 %v795
    %v1541 = vunpack.c.h.b16 %v795
    %v1542 = vunpack.c.l.b16 %v796
    %v1543 = vunpack.c.h.b16 %v796
    %v1544 = vunpack.c.l.b16 %v797
    %v1545 = vunpack.c.h.b16 %v797
    %v1546 = vunpack.c.l.b16 %v798
    %v1547 = vunpack.c.h.b16 %v798
    %v1548 = vunpack.c.l.b16 %v799
    %v1549 = vunpack.c.h.b16 %v799
    %v1550 = vunpack.c.l.b16 %v800
    %v1551 = vunpack.c.h.b16 %v800
    %v1552 = vunpack.c.l.b16 %v801
    %v1553 = vunpack.c.h.b16 %v801
    %v1554 = vunpack.c.l.b16 %v802
    %v1555 = vunpack.c.h.b16 %v802
    %v1556 = vunpack.c.l.b16 %v803
    %v1557 = vunpack.c.h.b16 %v803
    %v1558 = vunpack.c.l.b16 %v804
    %v1559 = vunpack.c.h.b16 %v804
    %v1560 = vunpack.c.l.b16 %v805
    %v1561 = vunpack.c.h.b16 %v805
    %v1562 = vunpack.c.l.b16 %v806
    %v1563 = vunpack.c.h.b16 %v806
    %v1564 = vunpack.c.l.b16 %v807
    %v1565 = vunpack.c.h.b16 %v807
    %v1566 = vunpack.c.l.b16 %v808
    %v1567 = vunpack.c.h.b16 %v808
    %v1568 = vunpack.c.l.b16 %v809
    %v1569 = vunpack.c.h.b16 %v809
    %v1570 = vunpack.c.l.b16 %v810
    %v1571 = vunpack.c.h.b16 %v810
    %v1572 = vunpack.c.l.b16 %v811
    %v1573 = vunpack.c.h.b16 %v811
    %v1574 = vunpack.c.l.b16 %v812
    %v1575 = vunpack.c.h.b16 %v812
    %v1576 = vunpack.c.l.b16 %v813
    %v1577 = vunpack.c.h.b16 %v813
    %v1578 = vunpack.c.l.b16 %v814
    %v1579 = vunpack.c.h.b16 %v814
    %v1580 = vunpack.c.l.b16 %v815
    %v1581 = vunpack.c.h.b16 %v815
    %v1582 = vunpack.c.l.b16 %v816
    %v1583 = vunpack.c.h.b16 %v816
    %v1584 = vunpack.c.l.b16 %v817
    %v1585 = vunpack.c.h.b16 %v817
    %v1586 = vpack.c.b16 %v1078, %v1074
    %v1587 = vpack.c.b16 %v1079, %v1075
    %v1588 = vpack.c.b16 %v1080, %v1076
    %v1589 = vpack.c.b16 %v1081, %v1077
    %v1590 = vpack.c.b16 %v1086, %v1082
    %v1591 = vpack.c.b16 %v1087, %v1083
    %v1592 = vpack.c.b16 %v1088, %v1084
    %v1593 = vpack.c.b16 %v1089, %v1085
    %v1594 = vpack.c.b16 %v1094, %v1090
    %v1595 = vpack.c.b16 %v1095, %v1091
    %v1596 = vpack.c.b16 %v1096, %v1092
    %v1597 = vpack.c.b16 %v1097, %v1093
    %v1598 = vpack.c.b16 %v1102, %v1098
    %v1599 = vpack.c.b16 %v1103, %v1099
    %v1600 = vpack.c.b16 %v1104, %v1100
    %v1601 = vpack.c.b16 %v1105, %v1101
    %v1602 = vpack.c.b16 %v1110, %v1106
    %v1603 = vpack.c.b16 %v1111, %v1107
    %v1604 = vpack.c.b16 %v1112, %v1108
    %v1605 = vpack.c.b16 %v1113, %v1109
    %v1606 = vpack.c.b16 %v1118, %v1114
    %v1607 = vpack.c.b16 %v1119, %v1115
    %v1608 = vpack.c.b16 %v1120, %v1116
    %v1609 = vpack.c.b16 %v1121, %v1117
    %v1610 = vpack.c.b16 %v1126, %v1122
    %v1611 = vpack.c.b16 %v1127, %v1123
    %v1612 = vpack.c.b16 %v1128, %v1124
    %v1613 = vpack.c.b16 %v1129, %v1125
    %v1614 = vpack.c.b16 %v1134, %v1130
    %v1615 = vpack.c.b16 %v1135, %v1131
    %v1616 = vpack.c.b16 %v1136, %v1132
    %v1617 = vpack.c.b16 %v1137, %v1133
    %v1618 = vpack.c.b16 %v1142, %v1138
    %v1619 = vpack.c.b16 %v1143, %v1139
    %v1620 = vpack.c.b16 %v1144, %v1140
    %v1621 = vpack.c.b16 %v1145, %v1141
    %v1622 = vpack.c.b16 %v1150, %v1146
    %v1623 = vpack.c.b16 %v1151, %v1147
    %v1624 = vpack.c.b16 %v1152, %v1148
    %v1625 = vpack.c.b16 %v1153, %v1149
    %v1626 = vpack.c.b16 %v1158, %v1154
    %v1627 = vpack.c.b16 %v1159, %v1155
    %v1628 = vpack.c.b16 %v1160, %v1156
    %v1629 = vpack.c.b16 %v1161, %v1157
    %v1630 = vpack.c.b16 %v1166, %v1162
    %v1631 = vpack.c.b16 %v1167, %v1163
    %v1632 = vpack.c.b16 %v1168, %v1164
    %v1633 = vpack.c.b16 %v1169, %v1165
    %v1634 = vpack.c.b16 %v1174, %v1170
    %v1635 = vpack.c.b16 %v1175, %v1171
    %v1636 = vpack.c.b16 %v1176, %v1172
    %v1637 = vpack.c.b16 %v1177, %v1173
    %v1638 = vpack.c.b16 %v1182, %v1178
    %v1639 = vpack.c.b16 %v1183, %v1179
    %v1640 = vpack.c.b16 %v1184, %v1180
    %v1641 = vpack.c.b16 %v1185, %v1181
    %v1642 = vpack.c.b16 %v1190, %v1186
    %v1643 = vpack.c.b16 %v1191, %v1187
    %v1644 = vpack.c.b16 %v1192, %v1188
    %v1645 = vpack.c.b16 %v1193, %v1189
    %v1646 = vpack.c.b16 %v1198, %v1194
    %v1647 = vpack.c.b16 %v1199, %v1195
    %v1648 = vpack.c.b16 %v1200, %v1196
    %v1649 = vpack.c.b16 %v1201, %v1197
    %v1650 = vpack.c.b16 %v1206, %v1202
    %v1651 = vpack.c.b16 %v1207, %v1203
    %v1652 = vpack.c.b16 %v1208, %v1204
    %v1653 = vpack.c.b16 %v1209, %v1205
    %v1654 = vpack.c.b16 %v1214, %v1210
    %v1655 = vpack.c.b16 %v1215, %v1211
    %v1656 = vpack.c.b16 %v1216, %v1212
    %v1657 = vpack.c.b16 %v1217, %v1213
    %v1658 = vpack.c.b16 %v1222, %v1218
    %v1659 = vpack.c.b16 %v1223, %v1219
    %v1660 = vpack.c.b16 %v1224, %v1220
    %v1661 = vpack.c.b16 %v1225, %v1221
    %v1662 = vpack.c.b16 %v1230, %v1226
    %v1663 = vpack.c.b16 %v1231, %v1227
    %v1664 = vpack.c.b16 %v1232, %v1228
    %v1665 = vpack.c.b16 %v1233, %v1229
    %v1666 = vpack.c.b16 %v1238, %v1234
    %v1667 = vpack.c.b16 %v1239, %v1235
    %v1668 = vpack.c.b16 %v1240, %v1236
    %v1669 = vpack.c.b16 %v1241, %v1237
    %v1670 = vpack.c.b16 %v1246, %v1242
    %v1671 = vpack.c.b16 %v1247, %v1243
    %v1672 = vpack.c.b16 %v1248, %v1244
    %v1673 = vpack.c.b16 %v1249, %v1245
    %v1674 = vpack.c.b16 %v1254, %v1250
    %v1675 = vpack.c.b16 %v1255, %v1251
    %v1676 = vpack.c.b16 %v1256, %v1252
    %v1677 = vpack.c.b16 %v1257, %v1253
    %v1678 = vpack.c.b16 %v1262, %v1258
    %v1679 = vpack.c.b16 %v1263, %v1259
    %v1680 = vpack.c.b16 %v1264, %v1260
    %v1681 = vpack.c.b16 %v1265, %v1261
    %v1682 = vpack.c.b16 %v1270, %v1266
    %v1683 = vpack.c.b16 %v1271, %v1267
    %v1684 = vpack.c.b16 %v1272, %v1268
    %v1685 = vpack.c.b16 %v1273, %v1269
    %v1686 = vpack.c.b16 %v1278, %v1274
    %v1687 = vpack.c.b16 %v1279, %v1275
    %v1688 = vpack.c.b16 %v1280, %v1276
    %v1689 = vpack.c.b16 %v1281, %v1277
    %v1690 = vpack.c.b16 %v1286, %v1282
    %v1691 = vpack.c.b16 %v1287, %v1283
    %v1692 = vpack.c.b16 %v1288, %v1284
    %v1693 = vpack.c.b16 %v1289, %v1285
    %v1694 = vpack.c.b16 %v1294, %v1290
    %v1695 = vpack.c.b16 %v1295, %v1291
    %v1696 = vpack.c.b16 %v1296, %v1292
    %v1697 = vpack.c.b16 %v1297, %v1293
    %v1698 = vpack.c.b16 %v1302, %v1298
    %v1699 = vpack.c.b16 %v1303, %v1299
    %v1700 = vpack.c.b16 %v1304, %v1300
    %v1701 = vpack.c.b16 %v1305, %v1301
    %v1702 = vpack.c.b16 %v1310, %v1306
    %v1703 = vpack.c.b16 %v1311, %v1307
    %v1704 = vpack.c.b16 %v1312, %v1308
    %v1705 = vpack.c.b16 %v1313, %v1309
    %v1706 = vpack.c.b16 %v1318, %v1314
    %v1707 = vpack.c.b16 %v1319, %v1315
    %v1708 = vpack.c.b16 %v1320, %v1316
    %v1709 = vpack.c.b16 %v1321, %v1317
    %v1710 = vpack.c.b16 %v1326, %v1322
    %v1711 = vpack.c.b16 %v1327, %v1323
    %v1712 = vpack.c.b16 %v1328, %v1324
    %v1713 = vpack.c.b16 %v1329, %v1325
    %v1714 = vpack.c.b16 %v1334, %v1330
    %v1715 = vpack.c.b16 %v1335, %v1331
    %v1716 = vpack.c.b16 %v1336, %v1332
    %v1717 = vpack.c.b16 %v1337, %v1333
    %v1718 = vpack.c.b16 %v1342, %v1338
    %v1719 = vpack.c.b16 %v1343, %v1339
    %v1720 = vpack.c.b16 %v1344, %v1340
    %v1721 = vpack.c.b16 %v1345, %v1341
    %v1722 = vpack.c.b16 %v1350, %v1346
    %v1723 = vpack.c.b16 %v1351, %v1347
    %v1724 = vpack.c.b16 %v1352, %v1348
    %v1725 = vpack.c.b16 %v1353, %v1349
    %v1726 = vpack.c.b16 %v1358, %v1354
    %v1727 = vpack.c.b16 %v1359, %v1355
    %v1728 = vpack.c.b16 %v1360, %v1356
    %v1729 = vpack.c.b16 %v1361, %v1357
    %v1730 = vpack.c.b16 %v1366, %v1362
    %v1731 = vpack.c.b16 %v1367, %v1363
    %v1732 = vpack.c.b16 %v1368, %v1364
    %v1733 = vpack.c.b16 %v1369, %v1365
    %v1734 = vpack.c.b16 %v1374, %v1370
    %v1735 = vpack.c.b16 %v1375, %v1371
    %v1736 = vpack.c.b16 %v1376, %v1372
    %v1737 = vpack.c.b16 %v1377, %v1373
    %v1738 = vpack.c.b16 %v1382, %v1378
    %v1739 = vpack.c.b16 %v1383, %v1379
    %v1740 = vpack.c.b16 %v1384, %v1380
    %v1741 = vpack.c.b16 %v1385, %v1381
    %v1742 = vpack.c.b16 %v1390, %v1386
    %v1743 = vpack.c.b16 %v1391, %v1387
    %v1744 = vpack.c.b16 %v1392, %v1388
    %v1745 = vpack.c.b16 %v1393, %v1389
    %v1746 = vpack.c.b16 %v1398, %v1394
    %v1747 = vpack.c.b16 %v1399, %v1395
    %v1748 = vpack.c.b16 %v1400, %v1396
    %v1749 = vpack.c.b16 %v1401, %v1397
    %v1750 = vpack.c.b16 %v1406, %v1402
    %v1751 = vpack.c.b16 %v1407, %v1403
    %v1752 = vpack.c.b16 %v1408, %v1404
    %v1753 = vpack.c.b16 %v1409, %v1405
    %v1754 = vpack.c.b16 %v1414, %v1410
    %v1755 = vpack.c.b16 %v1415, %v1411
    %v1756 = vpack.c.b16 %v1416, %v1412
    %v1757 = vpack.c.b16 %v1417, %v1413
    %v1758 = vpack.c.b16 %v1422, %v1418
    %v1759 = vpack.c.b16 %v1423, %v1419
    %v1760 = vpack.c.b16 %v1424, %v1420
    %v1761 = vpack.c.b16 %v1425, %v1421
    %v1762 = vpack.c.b16 %v1430, %v1426
    %v1763 = vpack.c.b16 %v1431, %v1427
    %v1764 = vpack.c.b16 %v1432, %v1428
    %v1765 = vpack.c.b16 %v1433, %v1429
    %v1766 = vpack.c.b16 %v1438, %v1434
    %v1767 = vpack.c.b16 %v1439, %v1435
    %v1768 = vpack.c.b16 %v1440, %v1436
    %v1769 = vpack.c.b16 %v1441, %v1437
    %v1770 = vpack.c.b16 %v1446, %v1442
    %v1771 = vpack.c.b16 %v1447, %v1443
    %v1772 = vpack.c.b16 %v1448, %v1444
    %v1773 = vpack.c.b16 %v1449, %v1445
    %v1774 = vpack.c.b16 %v1454, %v1450
    %v1775 = vpack.c.b16 %v1455, %v1451
    %v1776 = vpack.c.b16 %v1456, %v1452
    %v1777 = vpack.c.b16 %v1457, %v1453
    %v1778 = vpack.c.b16 %v1462, %v1458
    %v1779 = vpack.c.b16 %v1463, %v1459
    %v1780 = vpack.c.b16 %v1464, %v1460
    %v1781 = vpack.c.b16 %v1465, %v1461
    %v1782 = vpack.c.b16 %v1470, %v1466
    %v1783 = vpack.c.b16 %v1471, %v1467
    %v1784 = vpack.c.b16 %v1472, %v1468
    %v1785 = vpack.c.b16 %v1473, %v1469
    %v1786 = vpack.c.b16 %v1478, %v1474
    %v1787 = vpack.c.b16 %v1479, %v1475
    %v1788 = vpack.c.b16 %v1480, %v1476
    %v1789 = vpack.c.b16 %v1481, %v1477
    %v1790 = vpack.c.b16 %v1486, %v1482
    %v1791 = vpack.c.b16 %v1487, %v1483
    %v1792 = vpack.c.b16 %v1488, %v1484
    %v1793 = vpack.c.b16 %v1489, %v1485
    %v1794 = vpack.c.b16 %v1494, %v1490
    %v1795 = vpack.c.b16 %v1495, %v1491
    %v1796 = vpack.c.b16 %v1496, %v1492
    %v1797 = vpack.c.b16 %v1497, %v1493
    %v1798 = vpack.c.b16 %v1502, %v1498
    %v1799 = vpack.c.b16 %v1503, %v1499
    %v1800 = vpack.c.b16 %v1504, %v1500
    %v1801 = vpack.c.b16 %v1505, %v1501
    %v1802 = vpack.c.b16 %v1510, %v1506
    %v1803 = vpack.c.b16 %v1511, %v1507
    %v1804 = vpack.c.b16 %v1512, %v1508
    %v1805 = vpack.c.b16 %v1513, %v1509
    %v1806 = vpack.c.b16 %v1518, %v1514
    %v1807 = vpack.c.b16 %v1519, %v1515
    %v1808 = vpack.c.b16 %v1520, %v1516
    %v1809 = vpack.c.b16 %v1521, %v1517
    %v1810 = vpack.c.b16 %v1526, %v1522
    %v1811 = vpack.c.b16 %v1527, %v1523
    %v1812 = vpack.c.b16 %v1528, %v1524
    %v1813 = vpack.c.b16 %v1529, %v1525
    %v1814 = vpack.c.b16 %v1534, %v1530
    %v1815 = vpack.c.b16 %v1535, %v1531
    %v1816 = vpack.c.b16 %v1536, %v1532
    %v1817 = vpack.c.b16 %v1537, %v1533
    %v1818 = vpack.c.b16 %v1542, %v1538
    %v1819 = vpack.c.b16 %v1543, %v1539
    %v1820 = vpack.c.b16 %v1544, %v1540
    %v1821 = vpack.c.b16 %v1545, %v1541
    %v1822 = vpack.c.b16 %v1550, %v1546
    %v1823 = vpack.c.b16 %v1551, %v1547
    %v1824 = vpack.c.b16 %v1552, %v1548
    %v1825 = vpack.c.b16 %v1553, %v1549
    %v1826 = vpack.c.b16 %v1558, %v1554
    %v1827 = vpack.c.b16 %v1559, %v1555
    %v1828 = vpack.c.b16 %v1560, %v1556
    %v1829 = vpack.c.b16 %v1561, %v1557
    %v1830 = vpack.c.b16 %v1566, %v1562
    %v1831 = vpack.c.b16 %v1567, %v1563
    %v1832 = vpack.c.b16 %v1568, %v1564
    %v1833 = vpack.c.b16 %v1569, %v1565
    %v1834 = vpack.c.b16 %v1574, %v1570
    %v1835 = vpack.c.b16 %v1575, %v1571
    %v1836 = vpack.c.b16 %v1576, %v1572
    %v1837 = vpack.c.b16 %v1577, %v1573
    %v1838 = vpack.c.b16 %v1582, %v1578
    %v1839 = vpack.c.b16 %v1583, %v1579
    %v1840 = vpack.c.b16 %v1584, %v1580
    %v1841 = vpack.c.b16 %v1585, %v1581
    %2098 = vmatprep.subr.bf16.mxu0 %v1587
    %2099 = vmatpush1.bf16.msra.mxu0 %v1586
    %2100 = vmatprep.subr.bf16.mxu0 %v1591
    %2101 = vmatpush1.bf16.msra.mxu0 %v1590
    %2102 = vmatprep.subr.bf16.mxu0 %v1595
    %2103 = vmatpush1.bf16.msra.mxu0 %v1594
    %2104 = vmatprep.subr.bf16.mxu0 %v1599
    %2105 = vmatpush1.bf16.msra.mxu0 %v1598
    %2106 = vmatprep.subr.bf16.mxu0 %v1603
    %2107 = vmatpush1.bf16.msra.mxu0 %v1602
    %2108 = vmatprep.subr.bf16.mxu0 %v1607
    %2109 = vmatpush1.bf16.msra.mxu0 %v1606
    %2110 = vmatprep.subr.bf16.mxu0 %v1611
    %2111 = vmatpush1.bf16.msra.mxu0 %v1610
    %2112 = vmatprep.subr.bf16.mxu0 %v1615
    %2113 = vmatpush1.bf16.msra.mxu0 %v1614
    %2114 = vmatprep.subr.bf16.mxu0 %v1619
    %2115 = vmatpush1.bf16.msra.mxu0 %v1618
    %2116 = vmatprep.subr.bf16.mxu0 %v1623
    %2117 = vmatpush1.bf16.msra.mxu0 %v1622
    %2118 = vmatprep.subr.bf16.mxu0 %v1627
    %2119 = vmatpush1.bf16.msra.mxu0 %v1626
    %2120 = vmatprep.subr.bf16.mxu0 %v1631
    %2121 = vmatpush1.bf16.msra.mxu0 %v1630
    %2122 = vmatprep.subr.bf16.mxu0 %v1635
    %2123 = vmatpush1.bf16.msra.mxu0 %v1634
    %2124 = vmatprep.subr.bf16.mxu0 %v1639
    %2125 = vmatpush1.bf16.msra.mxu0 %v1638
    %2126 = vmatprep.subr.bf16.mxu0 %v1643
    %2127 = vmatpush1.bf16.msra.mxu0 %v1642
    %2128 = vmatprep.subr.bf16.mxu0 %v1647
    %2129 = vmatpush1.bf16.msra.mxu0 %v1646
    %2130 = vmatprep.mubr.bf16.mxu0 %v555
    %2131 = vmatmul.mubr.bf16.gmra.mrb[0].mxu0 %v554
    %v2132 = vpop.f32.mrb[0].mxu0
    %v2133 = vadd.f32 0.0, %v2132
    %v2134 = vpop.f32.mrb[0].mxu0
    %v2135 = vadd.f32 0.0, %v2134
    %v2136 = vpop.f32.mrb[0].mxu0
    %v2137 = vpop.f32.mrb[0].mxu0
    %2138 = vdwg.mxu0
    %2139 = vmatprep.subr.bf16.mxu0 %v1651
    %2140 = vmatpush1.bf16.msra.mxu0 %v1650
    %2141 = vmatprep.subr.bf16.mxu0 %v1655
    %2142 = vmatpush1.bf16.msra.mxu0 %v1654
    %2143 = vmatprep.subr.bf16.mxu0 %v1659
    %2144 = vmatpush1.bf16.msra.mxu0 %v1658
    %2145 = vmatprep.subr.bf16.mxu0 %v1663
    %2146 = vmatpush1.bf16.msra.mxu0 %v1662
    %2147 = vmatprep.subr.bf16.mxu0 %v1667
    %2148 = vmatpush1.bf16.msra.mxu0 %v1666
    %2149 = vmatprep.subr.bf16.mxu0 %v1671
    %2150 = vmatpush1.bf16.msra.mxu0 %v1670
    %2151 = vmatprep.subr.bf16.mxu0 %v1675
    %2152 = vmatpush1.bf16.msra.mxu0 %v1674
    %2153 = vmatprep.subr.bf16.mxu0 %v1679
    %2154 = vmatpush1.bf16.msra.mxu0 %v1678
    %2155 = vmatprep.subr.bf16.mxu0 %v1683
    %2156 = vmatpush1.bf16.msra.mxu0 %v1682
    %2157 = vmatprep.subr.bf16.mxu0 %v1687
    %2158 = vmatpush1.bf16.msra.mxu0 %v1686
    %2159 = vmatprep.subr.bf16.mxu0 %v1691
    %2160 = vmatpush1.bf16.msra.mxu0 %v1690
    %2161 = vmatprep.subr.bf16.mxu0 %v1695
    %2162 = vmatpush1.bf16.msra.mxu0 %v1694
    %2163 = vmatprep.subr.bf16.mxu0 %v1699
    %2164 = vmatpush1.bf16.msra.mxu0 %v1698
    %2165 = vmatprep.subr.bf16.mxu0 %v1703
    %2166 = vmatpush1.bf16.msra.mxu0 %v1702
    %2167 = vmatprep.subr.bf16.mxu0 %v1707
    %2168 = vmatpush1.bf16.msra.mxu0 %v1706
    %2169 = vmatprep.subr.bf16.mxu0 %v1711
    %2170 = vmatpush1.bf16.msra.mxu0 %v1710
    %2171 = vmatprep.mubr.bf16.mxu0 %v557
    %2172 = vmatmul.mubr.bf16.gmra.mrb[0].mxu0 %v556
    %v2173 = vpop.f32.mrb[0].mxu0
    %v2174 = vadd.f32 %v2133, %v2173
    %v2175 = vpop.f32.mrb[0].mxu0
    %v2176 = vadd.f32 %v2135, %v2175
    %v2177 = vpop.f32.mrb[0].mxu0
    %v2178 = vpop.f32.mrb[0].mxu0
    %2179 = vdwg.mxu0
    %2180 = vmatprep.subr.bf16.mxu0 %v1715
    %2181 = vmatpush1.bf16.msra.mxu0 %v1714
    %2182 = vmatprep.subr.bf16.mxu0 %v1719
    %2183 = vmatpush1.bf16.msra.mxu0 %v1718
    %2184 = vmatprep.subr.bf16.mxu0 %v1723
    %2185 = vmatpush1.bf16.msra.mxu0 %v1722
    %2186 = vmatprep.subr.bf16.mxu0 %v1727
    %2187 = vmatpush1.bf16.msra.mxu0 %v1726
    %2188 = vmatprep.subr.bf16.mxu0 %v1731
    %2189 = vmatpush1.bf16.msra.mxu0 %v1730
    %2190 = vmatprep.subr.bf16.mxu0 %v1735
    %2191 = vmatpush1.bf16.msra.mxu0 %v1734
    %2192 = vmatprep.subr.bf16.mxu0 %v1739
    %2193 = vmatpush1.bf16.msra.mxu0 %v1738
    %2194 = vmatprep.subr.bf16.mxu0 %v1743
    %2195 = vmatpush1.bf16.msra.mxu0 %v1742
    %2196 = vmatprep.subr.bf16.mxu0 %v1747
    %2197 = vmatpush1.bf16.msra.mxu0 %v1746
    %2198 = vmatprep.subr.bf16.mxu0 %v1751
    %2199 = vmatpush1.bf16.msra.mxu0 %v1750
    %2200 = vmatprep.subr.bf16.mxu0 %v1755
    %2201 = vmatpush1.bf16.msra.mxu0 %v1754
    %2202 = vmatprep.subr.bf16.mxu0 %v1759
    %2203 = vmatpush1.bf16.msra.mxu0 %v1758
    %2204 = vmatprep.subr.bf16.mxu0 %v1763
    %2205 = vmatpush1.bf16.msra.mxu0 %v1762
    %2206 = vmatprep.subr.bf16.mxu0 %v1767
    %2207 = vmatpush1.bf16.msra.mxu0 %v1766
    %2208 = vmatprep.subr.bf16.mxu0 %v1771
    %2209 = vmatpush1.bf16.msra.mxu0 %v1770
    %2210 = vmatprep.subr.bf16.mxu0 %v1775
    %2211 = vmatpush1.bf16.msra.mxu0 %v1774
    %2212 = vmatprep.mubr.bf16.mxu0 %v559
    %2213 = vmatmul.mubr.bf16.gmra.mrb[0].mxu0 %v558
    %v2214 = vpop.f32.mrb[0].mxu0
    %v2215 = vadd.f32 %v2174, %v2214
    %v2216 = vpop.f32.mrb[0].mxu0
    %v2217 = vadd.f32 %v2176, %v2216
    %v2218 = vpop.f32.mrb[0].mxu0
    %v2219 = vpop.f32.mrb[0].mxu0
    %2220 = vdwg.mxu0
    %2221 = vmatprep.subr.bf16.mxu0 %v1779
    %2222 = vmatpush1.bf16.msra.mxu0 %v1778
    %2223 = vmatprep.subr.bf16.mxu0 %v1783
    %2224 = vmatpush1.bf16.msra.mxu0 %v1782
    %2225 = vmatprep.subr.bf16.mxu0 %v1787
    %2226 = vmatpush1.bf16.msra.mxu0 %v1786
    %2227 = vmatprep.subr.bf16.mxu0 %v1791
    %2228 = vmatpush1.bf16.msra.mxu0 %v1790
    %2229 = vmatprep.subr.bf16.mxu0 %v1795
    %2230 = vmatpush1.bf16.msra.mxu0 %v1794
    %2231 = vmatprep.subr.bf16.mxu0 %v1799
    %2232 = vmatpush1.bf16.msra.mxu0 %v1798
    %2233 = vmatprep.subr.bf16.mxu0 %v1803
    %2234 = vmatpush1.bf16.msra.mxu0 %v1802
    %2235 = vmatprep.subr.bf16.mxu0 %v1807
    %2236 = vmatpush1.bf16.msra.mxu0 %v1806
    %2237 = vmatprep.subr.bf16.mxu0 %v1811
    %2238 = vmatpush1.bf16.msra.mxu0 %v1810
    %2239 = vmatprep.subr.bf16.mxu0 %v1815
    %2240 = vmatpush1.bf16.msra.mxu0 %v1814
    %2241 = vmatprep.subr.bf16.mxu0 %v1819
    %2242 = vmatpush1.bf16.msra.mxu0 %v1818
    %2243 = vmatprep.subr.bf16.mxu0 %v1823
    %2244 = vmatpush1.bf16.msra.mxu0 %v1822
    %2245 = vmatprep.subr.bf16.mxu0 %v1827
    %2246 = vmatpush1.bf16.msra.mxu0 %v1826
    %2247 = vmatprep.subr.bf16.mxu0 %v1831
    %2248 = vmatpush1.bf16.msra.mxu0 %v1830
    %2249 = vmatprep.subr.bf16.mxu0 %v1835
    %2250 = vmatpush1.bf16.msra.mxu0 %v1834
    %2251 = vmatprep.subr.bf16.mxu0 %v1839
    %2252 = vmatpush1.bf16.msra.mxu0 %v1838
    %2253 = vmatprep.mubr.bf16.mxu0 %v561
    %2254 = vmatmul.mubr.bf16.gmra.mrb[0].mxu0 %v560
    %v2255 = vpop.f32.mrb[0].mxu0
    %v2256 = vadd.f32 %v2215, %v2255
    %v2257 = vpop.f32.mrb[0].mxu0
    %v2258 = vadd.f32 %v2217, %v2257
    %v2259 = vpop.f32.mrb[0].mxu0
    %v2260 = vpop.f32.mrb[0].mxu0
    %2261 = vdwg.mxu0
    %2262 = vmatprep.subr.bf16.mxu0 %v1589
    %2263 = vmatpush1.bf16.msra.mxu0 %v1588
    %2264 = vmatprep.subr.bf16.mxu0 %v1593
    %2265 = vmatpush1.bf16.msra.mxu0 %v1592
    %2266 = vmatprep.subr.bf16.mxu0 %v1597
    %2267 = vmatpush1.bf16.msra.mxu0 %v1596
    %2268 = vmatprep.subr.bf16.mxu0 %v1601
    %2269 = vmatpush1.bf16.msra.mxu0 %v1600
    %2270 = vmatprep.subr.bf16.mxu0 %v1605
    %2271 = vmatpush1.bf16.msra.mxu0 %v1604
    %2272 = vmatprep.subr.bf16.mxu0 %v1609
    %2273 = vmatpush1.bf16.msra.mxu0 %v1608
    %2274 = vmatprep.subr.bf16.mxu0 %v1613
    %2275 = vmatpush1.bf16.msra.mxu0 %v1612
    %2276 = vmatprep.subr.bf16.mxu0 %v1617
    %2277 = vmatpush1.bf16.msra.mxu0 %v1616
    %2278 = vmatprep.subr.bf16.mxu0 %v1621
    %2279 = vmatpush1.bf16.msra.mxu0 %v1620
    %2280 = vmatprep.subr.bf16.mxu0 %v1625
    %2281 = vmatpush1.bf16.msra.mxu0 %v1624
    %2282 = vmatprep.subr.bf16.mxu0 %v1629
    %2283 = vmatpush1.bf16.msra.mxu0 %v1628
    %2284 = vmatprep.subr.bf16.mxu0 %v1633
    %2285 = vmatpush1.bf16.msra.mxu0 %v1632
    %2286 = vmatprep.subr.bf16.mxu0 %v1637
    %2287 = vmatpush1.bf16.msra.mxu0 %v1636
    %2288 = vmatprep.subr.bf16.mxu0 %v1641
    %2289 = vmatpush1.bf16.msra.mxu0 %v1640
    %2290 = vmatprep.subr.bf16.mxu0 %v1645
    %2291 = vmatpush1.bf16.msra.mxu0 %v1644
    %2292 = vmatprep.subr.bf16.mxu0 %v1649
    %2293 = vmatpush1.bf16.msra.mxu0 %v1648
    %2294 = vmatprep.mubr.bf16.mxu0 %v555
    %2295 = vmatmul.mubr.bf16.gmra.mrb[0].mxu0 %v554
    %v2296 = vpop.f32.mrb[0].mxu0
    %v2297 = vadd.f32 0.0, %v2296
    %v2298 = vpop.f32.mrb[0].mxu0
    %v2299 = vadd.f32 0.0, %v2298
    %v2300 = vpop.f32.mrb[0].mxu0
    %v2301 = vpop.f32.mrb[0].mxu0
    %2302 = vdwg.mxu0
    %2303 = vmatprep.subr.bf16.mxu0 %v1653
    %2304 = vmatpush1.bf16.msra.mxu0 %v1652
    %2305 = vmatprep.subr.bf16.mxu0 %v1657
    %2306 = vmatpush1.bf16.msra.mxu0 %v1656
    %2307 = vmatprep.subr.bf16.mxu0 %v1661
    %2308 = vmatpush1.bf16.msra.mxu0 %v1660
    %2309 = vmatprep.subr.bf16.mxu0 %v1665
    %2310 = vmatpush1.bf16.msra.mxu0 %v1664
    %2311 = vmatprep.subr.bf16.mxu0 %v1669
    %2312 = vmatpush1.bf16.msra.mxu0 %v1668
    %2313 = vmatprep.subr.bf16.mxu0 %v1673
    %2314 = vmatpush1.bf16.msra.mxu0 %v1672
    %2315 = vmatprep.subr.bf16.mxu0 %v1677
    %2316 = vmatpush1.bf16.msra.mxu0 %v1676
    %2317 = vmatprep.subr.bf16.mxu0 %v1681
    %2318 = vmatpush1.bf16.msra.mxu0 %v1680
    %2319 = vmatprep.subr.bf16.mxu0 %v1685
    %2320 = vmatpush1.bf16.msra.mxu0 %v1684
    %2321 = vmatprep.subr.bf16.mxu0 %v1689
    %2322 = vmatpush1.bf16.msra.mxu0 %v1688
    %2323 = vmatprep.subr.bf16.mxu0 %v1693
    %2324 = vmatpush1.bf16.msra.mxu0 %v1692
    %2325 = vmatprep.subr.bf16.mxu0 %v1697
    %2326 = vmatpush1.bf16.msra.mxu0 %v1696
    %2327 = vmatprep.subr.bf16.mxu0 %v1701
    %2328 = vmatpush1.bf16.msra.mxu0 %v1700
    %2329 = vmatprep.subr.bf16.mxu0 %v1705
    %2330 = vmatpush1.bf16.msra.mxu0 %v1704
    %2331 = vmatprep.subr.bf16.mxu0 %v1709
    %2332 = vmatpush1.bf16.msra.mxu0 %v1708
    %2333 = vmatprep.subr.bf16.mxu0 %v1713
    %2334 = vmatpush1.bf16.msra.mxu0 %v1712
    %2335 = vmatprep.mubr.bf16.mxu0 %v557
    %2336 = vmatmul.mubr.bf16.gmra.mrb[0].mxu0 %v556
    %v2337 = vpop.f32.mrb[0].mxu0
    %v2338 = vadd.f32 %v2297, %v2337
    %v2339 = vpop.f32.mrb[0].mxu0
    %v2340 = vadd.f32 %v2299, %v2339
    %v2341 = vpop.f32.mrb[0].mxu0
    %v2342 = vpop.f32.mrb[0].mxu0
    %2343 = vdwg.mxu0
    %2344 = vmatprep.subr.bf16.mxu0 %v1717
    %2345 = vmatpush1.bf16.msra.mxu0 %v1716
    %2346 = vmatprep.subr.bf16.mxu0 %v1721
    %2347 = vmatpush1.bf16.msra.mxu0 %v1720
    %2348 = vmatprep.subr.bf16.mxu0 %v1725
    %2349 = vmatpush1.bf16.msra.mxu0 %v1724
    %2350 = vmatprep.subr.bf16.mxu0 %v1729
    %2351 = vmatpush1.bf16.msra.mxu0 %v1728
    %2352 = vmatprep.subr.bf16.mxu0 %v1733
    %2353 = vmatpush1.bf16.msra.mxu0 %v1732
    %2354 = vmatprep.subr.bf16.mxu0 %v1737
    %2355 = vmatpush1.bf16.msra.mxu0 %v1736
    %2356 = vmatprep.subr.bf16.mxu0 %v1741
    %2357 = vmatpush1.bf16.msra.mxu0 %v1740
    %2358 = vmatprep.subr.bf16.mxu0 %v1745
    %2359 = vmatpush1.bf16.msra.mxu0 %v1744
    %2360 = vmatprep.subr.bf16.mxu0 %v1749
    %2361 = vmatpush1.bf16.msra.mxu0 %v1748
    %2362 = vmatprep.subr.bf16.mxu0 %v1753
    %2363 = vmatpush1.bf16.msra.mxu0 %v1752
    %2364 = vmatprep.subr.bf16.mxu0 %v1757
    %2365 = vmatpush1.bf16.msra.mxu0 %v1756
    %2366 = vmatprep.subr.bf16.mxu0 %v1761
    %2367 = vmatpush1.bf16.msra.mxu0 %v1760
    %2368 = vmatprep.subr.bf16.mxu0 %v1765
    %2369 = vmatpush1.bf16.msra.mxu0 %v1764
    %2370 = vmatprep.subr.bf16.mxu0 %v1769
    %2371 = vmatpush1.bf16.msra.mxu0 %v1768
    %2372 = vmatprep.subr.bf16.mxu0 %v1773
    %2373 = vmatpush1.bf16.msra.mxu0 %v1772
    %2374 = vmatprep.subr.bf16.mxu0 %v1777
    %2375 = vmatpush1.bf16.msra.mxu0 %v1776
    %2376 = vmatprep.mubr.bf16.mxu0 %v559
    %2377 = vmatmul.mubr.bf16.gmra.mrb[0].mxu0 %v558
    %v2378 = vpop.f32.mrb[0].mxu0
    %v2379 = vadd.f32 %v2338, %v2378
    %v2380 = vpop.f32.mrb[0].mxu0
    %v2381 = vadd.f32 %v2340, %v2380
    %v2382 = vpop.f32.mrb[0].mxu0
    %v2383 = vpop.f32.mrb[0].mxu0
    %2384 = vdwg.mxu0
    %2385 = vmatprep.subr.bf16.mxu0 %v1781
    %2386 = vmatpush1.bf16.msra.mxu0 %v1780
    %2387 = vmatprep.subr.bf16.mxu0 %v1785
    %2388 = vmatpush1.bf16.msra.mxu0 %v1784
    %2389 = vmatprep.subr.bf16.mxu0 %v1789
    %2390 = vmatpush1.bf16.msra.mxu0 %v1788
    %2391 = vmatprep.subr.bf16.mxu0 %v1793
    %2392 = vmatpush1.bf16.msra.mxu0 %v1792
    %2393 = vmatprep.subr.bf16.mxu0 %v1797
    %2394 = vmatpush1.bf16.msra.mxu0 %v1796
    %2395 = vmatprep.subr.bf16.mxu0 %v1801
    %2396 = vmatpush1.bf16.msra.mxu0 %v1800
    %2397 = vmatprep.subr.bf16.mxu0 %v1805
    %2398 = vmatpush1.bf16.msra.mxu0 %v1804
    %2399 = vmatprep.subr.bf16.mxu0 %v1809
    %2400 = vmatpush1.bf16.msra.mxu0 %v1808
    %2401 = vmatprep.subr.bf16.mxu0 %v1813
    %2402 = vmatpush1.bf16.msra.mxu0 %v1812
    %2403 = vmatprep.subr.bf16.mxu0 %v1817
    %2404 = vmatpush1.bf16.msra.mxu0 %v1816
    %2405 = vmatprep.subr.bf16.mxu0 %v1821
    %2406 = vmatpush1.bf16.msra.mxu0 %v1820
    %2407 = vmatprep.subr.bf16.mxu0 %v1825
    %2408 = vmatpush1.bf16.msra.mxu0 %v1824
    %2409 = vmatprep.subr.bf16.mxu0 %v1829
    %2410 = vmatpush1.bf16.msra.mxu0 %v1828
    %2411 = vmatprep.subr.bf16.mxu0 %v1833
    %2412 = vmatpush1.bf16.msra.mxu0 %v1832
    %2413 = vmatprep.subr.bf16.mxu0 %v1837
    %2414 = vmatpush1.bf16.msra.mxu0 %v1836
    %2415 = vmatprep.subr.bf16.mxu0 %v1841
    %2416 = vmatpush1.bf16.msra.mxu0 %v1840
    %2417 = vmatprep.mubr.bf16.mxu0 %v561
    %2418 = vmatmul.mubr.bf16.gmra.mrb[0].mxu0 %v560
    %v2419 = vpop.f32.mrb[0].mxu0
    %v2420 = vadd.f32 %v2379, %v2419
    %v2421 = vpop.f32.mrb[0].mxu0
    %v2422 = vadd.f32 %v2381, %v2421
    %v2423 = vpop.f32.mrb[0].mxu0
    %v2424 = vpop.f32.mrb[0].mxu0
    %2425 = vdwg.mxu0
    %vm2426 = vcmp.ge.f32.partialorder %v2256, 0.0
    %vm2427 = vcmp.ge.f32.partialorder %v2258, 0.0
    %vm2428 = vcmp.ge.f32.partialorder %v2420, 0.0
    %vm2429 = vcmp.ge.f32.partialorder %v2422, 0.0
    %v2430 = vmul.f32 %v2256, 0.01
    %v2431 = vmul.f32 %v2258, 0.01
    %v2432 = vmul.f32 %v2420, 0.01
    %v2433 = vmul.f32 %v2422, 0.01
    %v2434 = vsel %vm2426, %v2256, %v2430
    %v2435 = vsel %vm2427, %v2258, %v2431
    %v2436 = vsel %vm2428, %v2420, %v2432
    %v2437 = vsel %vm2429, %v2422, %v2433
    %v2438 = vpack.c.bf16 %v2434, %v2434
    %v2439 = vpack.c.bf16 %v2435, %v2435
    %v2440 = vpack.c.bf16 %v2436, %v2436
    %v2441 = vpack.c.bf16 %v2437, %v2437
    %v2442 = vld [vmem:[#allocation7] sm:$0xf]
    %v2443 = vld [vmem:[#allocation7 + $0x4] sm:$0xf]
    %v2444 = vld [vmem:[#allocation7 + $0x8] sm:$0xf]
    %v2445 = vld [vmem:[#allocation7 + $0xc] sm:$0xf]
    %v2446 = vld [vmem:[#allocation7 + $0x10] sm:$0xf]
    %v2447 = vld [vmem:[#allocation7 + $0x14] sm:$0xf]
    %v2448 = vld [vmem:[#allocation7 + $0x18] sm:$0xf]
    %v2449 = vld [vmem:[#allocation7 + $0x1c] sm:$0xf]
    %v2450 = vld [vmem:[#allocation7 + $0x20] sm:$0xf]
    %v2451 = vld [vmem:[#allocation7 + $0x24] sm:$0xf]
    %v2452 = vld [vmem:[#allocation7 + $0x28] sm:$0xf]
    %v2453 = vld [vmem:[#allocation7 + $0x2c] sm:$0xf]
    %v2454 = vld [vmem:[#allocation7 + $0x30] sm:$0xf]
    %v2455 = vld [vmem:[#allocation7 + $0x34] sm:$0xf]
    %v2456 = vld [vmem:[#allocation7 + $0x38] sm:$0xf]
    %v2457 = vld [vmem:[#allocation7 + $0x3c] sm:$0xf]
    %v2458 = vld [vmem:[#allocation7 + $0x40] sm:$0xf]
    %v2459 = vld [vmem:[#allocation7 + $0x44] sm:$0xf]
    %v2460 = vld [vmem:[#allocation7 + $0x48] sm:$0xf]
    %v2461 = vld [vmem:[#allocation7 + $0x4c] sm:$0xf]
    %v2462 = vld [vmem:[#allocation7 + $0x50] sm:$0xf]
    %v2463 = vld [vmem:[#allocation7 + $0x54] sm:$0xf]
    %v2464 = vld [vmem:[#allocation7 + $0x58] sm:$0xf]
    %v2465 = vld [vmem:[#allocation7 + $0x5c] sm:$0xf]
    %v2466 = vld [vmem:[#allocation7 + $0x60] sm:$0xf]
    %v2467 = vld [vmem:[#allocation7 + $0x64] sm:$0xf]
    %v2468 = vld [vmem:[#allocation7 + $0x68] sm:$0xf]
    %v2469 = vld [vmem:[#allocation7 + $0x6c] sm:$0xf]
    %v2470 = vld [vmem:[#allocation7 + $0x70] sm:$0xf]
    %v2471 = vld [vmem:[#allocation7 + $0x74] sm:$0xf]
    %v2472 = vld [vmem:[#allocation7 + $0x78] sm:$0xf]
    %v2473 = vld [vmem:[#allocation7 + $0x7c] sm:$0xf]
    %v2474 = vld [vmem:[#allocation7 + $0x80] sm:$0xf]
    %v2475 = vld [vmem:[#allocation7 + $0x84] sm:$0xf]
    %v2476 = vld [vmem:[#allocation7 + $0x88] sm:$0xf]
    %v2477 = vld [vmem:[#allocation7 + $0x8c] sm:$0xf]
    %v2478 = vld [vmem:[#allocation7 + $0x90] sm:$0xf]
    %v2479 = vld [vmem:[#allocation7 + $0x94] sm:$0xf]
    %v2480 = vld [vmem:[#allocation7 + $0x98] sm:$0xf]
    %v2481 = vld [vmem:[#allocation7 + $0x9c] sm:$0xf]
    %v2482 = vld [vmem:[#allocation7 + $0xa0] sm:$0xf]
    %v2483 = vld [vmem:[#allocation7 + $0xa4] sm:$0xf]
    %v2484 = vld [vmem:[#allocation7 + $0xa8] sm:$0xf]
    %v2485 = vld [vmem:[#allocation7 + $0xac] sm:$0xf]
    %v2486 = vld [vmem:[#allocation7 + $0xb0] sm:$0xf]
    %v2487 = vld [vmem:[#allocation7 + $0xb4] sm:$0xf]
    %v2488 = vld [vmem:[#allocation7 + $0xb8] sm:$0xf]
    %v2489 = vld [vmem:[#allocation7 + $0xbc] sm:$0xf]
    %v2490 = vld [vmem:[#allocation7 + $0xc0] sm:$0xf]
    %v2491 = vld [vmem:[#allocation7 + $0xc4] sm:$0xf]
    %v2492 = vld [vmem:[#allocation7 + $0xc8] sm:$0xf]
    %v2493 = vld [vmem:[#allocation7 + $0xcc] sm:$0xf]
    %v2494 = vld [vmem:[#allocation7 + $0xd0] sm:$0xf]
    %v2495 = vld [vmem:[#allocation7 + $0xd4] sm:$0xf]
    %v2496 = vld [vmem:[#allocation7 + $0xd8] sm:$0xf]
    %v2497 = vld [vmem:[#allocation7 + $0xdc] sm:$0xf]
    %v2498 = vld [vmem:[#allocation7 + $0xe0] sm:$0xf]
    %v2499 = vld [vmem:[#allocation7 + $0xe4] sm:$0xf]
    %v2500 = vld [vmem:[#allocation7 + $0xe8] sm:$0xf]
    %v2501 = vld [vmem:[#allocation7 + $0xec] sm:$0xf]
    %v2502 = vld [vmem:[#allocation7 + $0xf0] sm:$0xf]
    %v2503 = vld [vmem:[#allocation7 + $0xf4] sm:$0xf]
    %v2504 = vld [vmem:[#allocation7 + $0xf8] sm:$0xf]
    %v2505 = vld [vmem:[#allocation7 + $0xfc] sm:$0xf]
    %v2570 = vunpack.c.l.b16 %v2442
    %v2571 = vunpack.c.l.b16 %v2443
    %v2572 = vunpack.c.l.b16 %v2444
    %v2573 = vunpack.c.l.b16 %v2445
    %v2574 = vunpack.c.l.b16 %v2446
    %v2575 = vunpack.c.l.b16 %v2447
    %v2576 = vunpack.c.l.b16 %v2448
    %v2577 = vunpack.c.l.b16 %v2449
    %v2578 = vunpack.c.l.b16 %v2450
    %v2579 = vunpack.c.l.b16 %v2451
    %v2580 = vunpack.c.l.b16 %v2452
    %v2581 = vunpack.c.l.b16 %v2453
    %v2582 = vunpack.c.l.b16 %v2454
    %v2583 = vunpack.c.l.b16 %v2455
    %v2584 = vunpack.c.l.b16 %v2456
    %v2585 = vunpack.c.l.b16 %v2457
    %v2586 = vunpack.c.l.b16 %v2458
    %v2587 = vunpack.c.l.b16 %v2459
    %v2588 = vunpack.c.l.b16 %v2460
    %v2589 = vunpack.c.l.b16 %v2461
    %v2590 = vunpack.c.l.b16 %v2462
    %v2591 = vunpack.c.l.b16 %v2463
    %v2592 = vunpack.c.l.b16 %v2464
    %v2593 = vunpack.c.l.b16 %v2465
    %v2594 = vunpack.c.l.b16 %v2466
    %v2595 = vunpack.c.l.b16 %v2467
    %v2596 = vunpack.c.l.b16 %v2468
    %v2597 = vunpack.c.l.b16 %v2469
    %v2598 = vunpack.c.l.b16 %v2470
    %v2599 = vunpack.c.l.b16 %v2471
    %v2600 = vunpack.c.l.b16 %v2472
    %v2601 = vunpack.c.l.b16 %v2473
    %v2602 = vunpack.c.l.b16 %v2474
    %v2603 = vunpack.c.l.b16 %v2475
    %v2604 = vunpack.c.l.b16 %v2476
    %v2605 = vunpack.c.l.b16 %v2477
    %v2606 = vunpack.c.l.b16 %v2478
    %v2607 = vunpack.c.l.b16 %v2479
    %v2608 = vunpack.c.l.b16 %v2480
    %v2609 = vunpack.c.l.b16 %v2481
    %v2610 = vunpack.c.l.b16 %v2482
    %v2611 = vunpack.c.l.b16 %v2483
    %v2612 = vunpack.c.l.b16 %v2484
    %v2613 = vunpack.c.l.b16 %v2485
    %v2614 = vunpack.c.l.b16 %v2486
    %v2615 = vunpack.c.l.b16 %v2487
    %v2616 = vunpack.c.l.b16 %v2488
    %v2617 = vunpack.c.l.b16 %v2489
    %v2618 = vunpack.c.l.b16 %v2490
    %v2619 = vunpack.c.l.b16 %v2491
    %v2620 = vunpack.c.l.b16 %v2492
    %v2621 = vunpack.c.l.b16 %v2493
    %v2622 = vunpack.c.l.b16 %v2494
    %v2623 = vunpack.c.l.b16 %v2495
    %v2624 = vunpack.c.l.b16 %v2496
    %v2625 = vunpack.c.l.b16 %v2497
    %v2626 = vunpack.c.l.b16 %v2498
    %v2627 = vunpack.c.l.b16 %v2499
    %v2628 = vunpack.c.l.b16 %v2500
    %v2629 = vunpack.c.l.b16 %v2501
    %v2630 = vunpack.c.l.b16 %v2502
    %v2631 = vunpack.c.l.b16 %v2503
    %v2632 = vunpack.c.l.b16 %v2504
    %v2633 = vunpack.c.l.b16 %v2505
    %v2634 = vpack.c.b16 %v2571, %v2570
    %v2635 = vpack.c.b16 %v2573, %v2572
    %v2636 = vpack.c.b16 %v2575, %v2574
    %v2637 = vpack.c.b16 %v2577, %v2576
    %v2638 = vpack.c.b16 %v2579, %v2578
    %v2639 = vpack.c.b16 %v2581, %v2580
    %v2640 = vpack.c.b16 %v2583, %v2582
    %v2641 = vpack.c.b16 %v2585, %v2584
    %v2642 = vpack.c.b16 %v2587, %v2586
    %v2643 = vpack.c.b16 %v2589, %v2588
    %v2644 = vpack.c.b16 %v2591, %v2590
    %v2645 = vpack.c.b16 %v2593, %v2592
    %v2646 = vpack.c.b16 %v2595, %v2594
    %v2647 = vpack.c.b16 %v2597, %v2596
    %v2648 = vpack.c.b16 %v2599, %v2598
    %v2649 = vpack.c.b16 %v2601, %v2600
    %v2650 = vpack.c.b16 %v2603, %v2602
    %v2651 = vpack.c.b16 %v2605, %v2604
    %v2652 = vpack.c.b16 %v2607, %v2606
    %v2653 = vpack.c.b16 %v2609, %v2608
    %v2654 = vpack.c.b16 %v2611, %v2610
    %v2655 = vpack.c.b16 %v2613, %v2612
    %v2656 = vpack.c.b16 %v2615, %v2614
    %v2657 = vpack.c.b16 %v2617, %v2616
    %v2658 = vpack.c.b16 %v2619, %v2618
    %v2659 = vpack.c.b16 %v2621, %v2620
    %v2660 = vpack.c.b16 %v2623, %v2622
    %v2661 = vpack.c.b16 %v2625, %v2624
    %v2662 = vpack.c.b16 %v2627, %v2626
    %v2663 = vpack.c.b16 %v2629, %v2628
    %v2664 = vpack.c.b16 %v2631, %v2630
    %v2665 = vpack.c.b16 %v2633, %v2632
    %2698 = vmatprep.subr.bf16.mxu0 0
    %2699 = vmatpush1.bf16.msra.mxu0 %v2634
    %2700 = vmatprep.subr.bf16.mxu0 0
    %2701 = vmatpush1.bf16.msra.mxu0 %v2635
    %2702 = vmatprep.subr.bf16.mxu0 0
    %2703 = vmatpush1.bf16.msra.mxu0 %v2636
    %2704 = vmatprep.subr.bf16.mxu0 0
    %2705 = vmatpush1.bf16.msra.mxu0 %v2637
    %2706 = vmatprep.subr.bf16.mxu0 0
    %2707 = vmatpush1.bf16.msra.mxu0 %v2638
    %2708 = vmatprep.subr.bf16.mxu0 0
    %2709 = vmatpush1.bf16.msra.mxu0 %v2639
    %2710 = vmatprep.subr.bf16.mxu0 0
    %2711 = vmatpush1.bf16.msra.mxu0 %v2640
    %2712 = vmatprep.subr.bf16.mxu0 0
    %2713 = vmatpush1.bf16.msra.mxu0 %v2641
    %2714 = vmatprep.subr.bf16.mxu0 0
    %2715 = vmatpush1.bf16.msra.mxu0 %v2642
    %2716 = vmatprep.subr.bf16.mxu0 0
    %2717 = vmatpush1.bf16.msra.mxu0 %v2643
    %2718 = vmatprep.subr.bf16.mxu0 0
    %2719 = vmatpush1.bf16.msra.mxu0 %v2644
    %2720 = vmatprep.subr.bf16.mxu0 0
    %2721 = vmatpush1.bf16.msra.mxu0 %v2645
    %2722 = vmatprep.subr.bf16.mxu0 0
    %2723 = vmatpush1.bf16.msra.mxu0 %v2646
    %2724 = vmatprep.subr.bf16.mxu0 0
    %2725 = vmatpush1.bf16.msra.mxu0 %v2647
    %2726 = vmatprep.subr.bf16.mxu0 0
    %2727 = vmatpush1.bf16.msra.mxu0 %v2648
    %2728 = vmatprep.subr.bf16.mxu0 0
    %2729 = vmatpush1.bf16.msra.mxu0 %v2649
    %2730 = vmatprep.mubr.bf16.mxu0 %v2439
    %2731 = vmatmul.mubr.bf16.gmra.mrb[0].mxu0 %v2438
    %v2732 = vpop.f32.mrb[0].mxu0
    %v2733 = vadd.f32 0.0, %v2732
    %v2734 = vpop.f32.mrb[0].mxu0
    %v2735 = vpop.f32.mrb[0].mxu0
    %v2736 = vpop.f32.mrb[0].mxu0
    %2737 = vdwg.mxu0
    %2738 = vmatprep.subr.bf16.mxu0 0
    %2739 = vmatpush1.bf16.msra.mxu0 %v2650
    %2740 = vmatprep.subr.bf16.mxu0 0
    %2741 = vmatpush1.bf16.msra.mxu0 %v2651
    %2742 = vmatprep.subr.bf16.mxu0 0
    %2743 = vmatpush1.bf16.msra.mxu0 %v2652
    %2744 = vmatprep.subr.bf16.mxu0 0
    %2745 = vmatpush1.bf16.msra.mxu0 %v2653
    %2746 = vmatprep.subr.bf16.mxu0 0
    %2747 = vmatpush1.bf16.msra.mxu0 %v2654
    %2748 = vmatprep.subr.bf16.mxu0 0
    %2749 = vmatpush1.bf16.msra.mxu0 %v2655
    %2750 = vmatprep.subr.bf16.mxu0 0
    %2751 = vmatpush1.bf16.msra.mxu0 %v2656
    %2752 = vmatprep.subr.bf16.mxu0 0
    %2753 = vmatpush1.bf16.msra.mxu0 %v2657
    %2754 = vmatprep.subr.bf16.mxu0 0
    %2755 = vmatpush1.bf16.msra.mxu0 %v2658
    %2756 = vmatprep.subr.bf16.mxu0 0
    %2757 = vmatpush1.bf16.msra.mxu0 %v2659
    %2758 = vmatprep.subr.bf16.mxu0 0
    %2759 = vmatpush1.bf16.msra.mxu0 %v2660
    %2760 = vmatprep.subr.bf16.mxu0 0
    %2761 = vmatpush1.bf16.msra.mxu0 %v2661
    %2762 = vmatprep.subr.bf16.mxu0 0
    %2763 = vmatpush1.bf16.msra.mxu0 %v2662
    %2764 = vmatprep.subr.bf16.mxu0 0
    %2765 = vmatpush1.bf16.msra.mxu0 %v2663
    %2766 = vmatprep.subr.bf16.mxu0 0
    %2767 = vmatpush1.bf16.msra.mxu0 %v2664
    %2768 = vmatprep.subr.bf16.mxu0 0
    %2769 = vmatpush1.bf16.msra.mxu0 %v2665
    %2770 = vmatprep.mubr.bf16.mxu0 %v2441
    %2771 = vmatmul.mubr.bf16.gmra.mrb[0].mxu0 %v2440
    %v2772 = vpop.f32.mrb[0].mxu0
    %v2773 = vadd.f32 %v2733, %v2772
    %v2774 = vpop.f32.mrb[0].mxu0
    %v2775 = vpop.f32.mrb[0].mxu0
    %v2776 = vpop.f32.mrb[0].mxu0
    %2777 = vdwg.mxu0
    %2778 = vst [vmem:[#allocation8] sm:$0xff] %v2773
    // Predicated region
    $region34: #{tpu_custom_call.1} parent=1 // pred_check
      _
    $region35: #{tpu_custom_call.1} parent=1 // pred_check_branch
      %2780 = sbr.rel (0) target = $region37
    $region36: #{tpu_custom_call.1} parent=1 // pred_region
      %s2782 = ssub.s32 128, 128
      %2783 = vsyncadd [#allocation4], %s2782
      %s2785 = sshll.u32 [#allocation8], 4
      %s2786 = int_to_ptr.vmem [resolvable:$true] %s2785
      %2788 = dma.vmem_to_hbm [thread:$0]  %s2786, 128, %s5, [#allocation4]
    $region37: #{tpu_custom_call.1} parent=1 // pred_fallthru
      _
    // Predicated region
    $region38: #{tpu_custom_call.1} parent=1 // pred_check
      _
    $region39: #{tpu_custom_call.1} parent=1 // pred_check_branch
      %2790 = sbr.rel (0) target = $region41
    $region40: #{tpu_custom_call.1} parent=1 // pred_region
      %2791 = dma.done [#allocation4], 128
    $region41: #{tpu_custom_call.1} parent=1 // pred_fallthru
      _
    %2792 = vsyncpa [#allocation3], 1
    %2793 = vsyncpa [#allocation6], 1
    %2794 = vsyncpa [#allocation4], 1

</llo_original>
